<compile_context>
chip_gen: v7x
topology: tpu7x:2x2x1
jax: 0.10.0
libtpu: 0.0.40
codegen_flags: <defaults>
</compile_context>

<pallas_src>
import functools

import jax
import jax.numpy as jnp
from jax.experimental import pallas as pl
from jax.experimental.pallas import tpu as pltpu

EPS = 1e-5


# --------------------------------------------------------------------------- kernel
def double_conv_kernel(x_ref, m1_ref, m2_ref, bnp_ref, r_ref, rt_ref, out_ref,
                       *, H, inv_n):
    """Whole (small) batch resident in VMEM, all tensors lane-dense.

    x_ref   : (B*H, W*Cin)  f32   input slab (lane axis = W*Cin)
    m1/m2   : (3, W*Ci, W*Co) bf16 banded conv weights, index 0/1/2 <-> kernel row -1/0/+1
    bnp_ref : (4, W*Cout)   f32   lane-broadcast [gamma1, beta1, gamma2, beta2]
    r_ref   : (W*Cout, Cout) f32  0/1 lane->channel sum matrix
    rt_ref  : (Cout, W*Cout) f32  0/1 channel->lane broadcast matrix
    out_ref : (B*H, W*Cout) f32
    """
    f32 = jnp.float32
    bf16 = jnp.bfloat16
    BH = x_ref.shape[0]

    def conv3x3(slab, m_ref):
        # Row-shifted copies of the slab via a 1-sublane roll (XLU) + boundary mask
        # (VPU); the mask zeroes rows h==0 / h==H-1 of each image, which also removes
        # the cross-image wraparound introduced by the roll.
        lanes = slab.shape[1]
        row = jax.lax.broadcasted_iota(jnp.int32, (BH, lanes), 0)
        up = jnp.where(row % H != 0, pltpu.roll(slab, shift=1, axis=0), 0.0)      # h-1
        dn = jnp.where(row % H != H - 1, pltpu.roll(slab, shift=BH - 1, axis=0), 0.0)  # h+1
        # bf16 MXU operands, f32 accumulation.
        acc = jnp.dot(up.astype(bf16), m_ref[0], preferred_element_type=f32)
        acc = acc + jnp.dot(slab.astype(bf16), m_ref[1], preferred_element_type=f32)
        acc = acc + jnp.dot(dn.astype(bf16), m_ref[2], preferred_element_type=f32)
        return acc                                                      # (B*H, W*Cout) f32

    def bn_relu(acc, g_l, be_l):
        # One-pass training-mode batch stats per channel (f32 throughout):
        # one fused matmul reduces sum and sum-of-squares over the lane (W) axis,
        # a sublane reduce finishes the (N,H) axis.
        both = jnp.concatenate([acc, acc * acc], axis=0)                # (2*BH, W*Cout)
        red = jnp.dot(both, r_ref[...], preferred_element_type=f32)     # (2*BH, Cout)
        s_c = jnp.sum(red[:BH], axis=0, keepdims=True) * inv_n          # (1, Cout) E[x]
        q_c = jnp.sum(red[BH:], axis=0, keepdims=True) * inv_n          # (1, Cout) E[x^2]
        # Broadcast mean / E[x^2] back to the lane layout with a single M=2 matmul;
        # scale/shift stay (1, W*Cout) rows and broadcast over sublanes below.
        mq_l = jnp.dot(jnp.concatenate([s_c, q_c], axis=0), rt_ref[...],
                       preferred_element_type=f32)                      # (2, W*Cout)
        mean_l = mq_l[0:1, :]
        var_l = mq_l[1:2, :] - mean_l * mean_l                          # biased variance
        # TODO(synk): one-pass E[x^2]-E[x]^2 is fine at these magnitudes; switch to a
        # centered two-pass reduction if tolerances tighten.
        scale_l = g_l * jax.lax.rsqrt(var_l + EPS)                      # (1, W*Cout)
        shift_l = be_l - mean_l * scale_l                               # (1, W*Cout)
        return jnp.maximum(acc * scale_l + shift_l, 0.0)                # sublane-bcast

    bnp = bnp_ref[...]
    h1 = bn_relu(conv3x3(x_ref[...], m1_ref), bnp[0:1, :], bnp[1:2, :])
    h2 = bn_relu(conv3x3(h1, m2_ref), bnp[2:3, :], bnp[3:4, :])
    out_ref[...] = h2.astype(out_ref.dtype)


# ------------------------------------------------------------------ wrapper helpers
def _banded_conv_weights(w_hwio, W):
    """(3,3,Ci,Co) HWIO -> (3, W*Ci, W*Co); index 0/1/2 corresponds to dh = -1/0/+1."""
    Ci, Co = w_hwio.shape[2], w_hwio.shape[3]
    mats = []
    for kh in range(3):
        m = jnp.zeros((W * Ci, W * Co), jnp.float32)
        for kw in range(3):
            dw = kw - 1
            s = jnp.eye(W, k=-dw, dtype=jnp.float32)    # s[w', w] = 1 iff w' = w + dw
            m = m + jnp.einsum("pq,ic->piqc", s, w_hwio[kh, kw]).reshape(W * Ci, W * Co)
        mats.append(m)
    return jnp.stack(mats)


def _channel_mats(W, Co):
    """R: (W*Co, Co) lane->channel sum;  RT: (Co, W*Co) channel->lane broadcast."""
    eye = jnp.eye(Co, dtype=jnp.float32)
    return jnp.tile(eye, (W, 1)), jnp.tile(eye, (1, W))


# --------------------------------------------------------------------------- wrapper
@jax.jit
def double_conv(x_nchw, params):
    """NCHW in -> NCHW out; kernel works on lane-dense (B*H, W*C) slabs."""
    x = jnp.transpose(x_nchw, (0, 2, 3, 1)).astype(jnp.float32)         # NHWC
    B, H, W, Cin = x.shape
    Cout = params["w1"].shape[-1]
    BH, WCo = B * H, W * Cout

    x_slab = x.reshape(BH, W * Cin)
    # bf16 weights for the MXU (f32 accumulation happens in-kernel).
    m1 = _banded_conv_weights(params["w1"], W).astype(jnp.bfloat16)     # (3, W*Cin, W*Cout)
    m2 = _banded_conv_weights(params["w2"], W).astype(jnp.bfloat16)     # (3, W*Cout, W*Cout)
    r_mat, rt_mat = _channel_mats(W, Cout)
    # gamma/beta packed as one lane-dense (4, W*Cout) slab: lane w*Cout + c -> value[c].
    bnp = jnp.concatenate(
        [jnp.tile(params[k].astype(jnp.float32), (1, W))
         for k in ("g1", "be1", "g2", "be2")], axis=0)

    # Conv biases b1/b2 are intentionally NOT passed: training-mode BN cancels them.
    args = (x_slab, m1, m2, bnp, r_mat, rt_mat)
    in_specs = [pl.BlockSpec(a.shape, (lambda i, nd=a.ndim: (0,) * nd)) for a in args]

    kern = functools.partial(double_conv_kernel, H=H, inv_n=1.0 / float(B * H * W))

    out_slab = pl.pallas_call(
        kern,
        out_shape=jax.ShapeDtypeStruct((BH, WCo), jnp.float32),
        grid=(1,),
        in_specs=in_specs,
        out_specs=pl.BlockSpec((BH, WCo), lambda i: (0, 0)),
        compiler_params=pltpu.CompilerParams(
            dimension_semantics=("arbitrary",),
            vmem_limit_bytes=32 * 1024 * 1024),
    )(*args)

    out = out_slab.reshape(B, H, W, Cout)
    return jnp.transpose(out, (0, 3, 1, 2))                             # back to NCHW


# ------------------------------------------------------------------------ test setup
def init_params(key, in_ch, out_ch):
    ks = jax.random.split(key, 8)
    f32 = jnp.float32
    return {
        "w1": 0.2 * jax.random.normal(ks[0], (3, 3, in_ch, out_ch), f32),
        "b1": 0.1 * jax.random.normal(ks[1], (1, out_ch), f32),
        "g1": 1.0 + 0.1 * jax.random.normal(ks[2], (1, out_ch), f32),
        "be1": 0.1 * jax.random.normal(ks[3], (1, out_ch), f32),
        "w2": 0.2 * jax.random.normal(ks[4], (3, 3, out_ch, out_ch), f32),
        "b2": 0.1 * jax.random.normal(ks[5], (1, out_ch), f32),
        "g2": 1.0 + 0.1 * jax.random.normal(ks[6], (1, out_ch), f32),
        "be2": 0.1 * jax.random.normal(ks[7], (1, out_ch), f32),
    }


def reference_double_conv(x_nchw, p):
    """Pure-JAX f32 reference mirroring PyTorch (NCHW conv + bias + training-mode BN)."""
    def bn_relu(y, g, b):
        mean = y.mean(axis=(0, 2, 3), keepdims=True)
        var = ((y - mean) ** 2).mean(axis=(0, 2, 3), keepdims=True)
        y = (y - mean) * jax.lax.rsqrt(var + EPS) * g.reshape(1, -1, 1, 1) \
            + b.reshape(1, -1, 1, 1)
        return jnp.maximum(y, 0.0)

    def conv(y, w_hwio, bias):
        w_oihw = jnp.transpose(w_hwio, (3, 2, 0, 1))
        y = jax.lax.conv_general_dilated(
            y, w_oihw, (1, 1), "SAME",
            dimension_numbers=("NCHW", "OIHW", "NCHW"),
            precision=jax.lax.Precision.HIGHEST)
        return y + bias.reshape(1, -1, 1, 1)

    y = bn_relu(conv(x_nchw, p["w1"], p["b1"]), p["g1"], p["be1"])
    y = bn_relu(conv(y, p["w2"], p["b2"]), p["g2"], p["be2"])
    return y


if __name__ == "__main__":
    B, IN_CH, OUT_CH, H, W = 2, 4, 8, 16, 16     # W * OUT_CH = 128 -> lane-dense

    key = jax.random.PRNGKey(0)
    k_x, k_p = jax.random.split(key)
    x = jax.random.normal(k_x, (B, IN_CH, H, W), jnp.float32)           # NCHW like PyTorch
    params = init_params(k_p, IN_CH, OUT_CH)

    out = double_conv(x, params)
    out = jax.block_until_ready(out)

    ref = reference_double_conv(x, params)
    assert out.shape == (B, OUT_CH, H, W), out.shape
    assert bool(jnp.all(jnp.isfinite(out)))
    # Kernel feeds the MXU bf16 operands (f32 accumulation), so the tolerance vs. the
    # f32/HIGHEST reference is bf16-class; mean-error check guards overall fidelity.
    assert bool(jnp.allclose(out, ref, rtol=5e-2, atol=5e-2)), \
        float(jnp.max(jnp.abs(out - ref)))
    assert float(jnp.mean(jnp.abs(out - ref))) < 1e-2

    print("KERNEL_OK")
</pallas_src>

<mosaic_0001>
module attributes {stable_mosaic.version = 11 : i64} {
  func.func @double_conv_kernel(%arg0: i32, %arg1: memref<32x64xf32, #tpu.memory_space<vmem>>, %arg2: memref<3x64x128xbf16, #tpu.memory_space<vmem>>, %arg3: memref<3x128x128xbf16, #tpu.memory_space<vmem>>, %arg4: memref<4x128xf32, #tpu.memory_space<vmem>>, %arg5: memref<128x8xf32, #tpu.memory_space<vmem>>, %arg6: memref<8x128xf32, #tpu.memory_space<vmem>>, %arg7: memref<32x128xf32, #tpu.memory_space<vmem>>) attributes {dimension_semantics = [#tpu.dimension_semantics<arbitrary>], iteration_bounds = array<i64: 1>, scalar_prefetch = 0 : i64, scratch_operands = 0 : i64, tpu.core_type = #tpu.core_type<tc>, window_params = [{pipeline_mode = #tpu.pipeline_mode<synchronous>, transform_indices = @transform_0, window_bounds = array<i64: 32, 64>}, {pipeline_mode = #tpu.pipeline_mode<synchronous>, transform_indices = @transform_1, window_bounds = array<i64: 3, 64, 128>}, {pipeline_mode = #tpu.pipeline_mode<synchronous>, transform_indices = @transform_2, window_bounds = array<i64: 3, 128, 128>}, {pipeline_mode = #tpu.pipeline_mode<synchronous>, transform_indices = @transform_3, window_bounds = array<i64: 4, 128>}, {pipeline_mode = #tpu.pipeline_mode<synchronous>, transform_indices = @transform_4, window_bounds = array<i64: 128, 8>}, {pipeline_mode = #tpu.pipeline_mode<synchronous>, transform_indices = @transform_5, window_bounds = array<i64: 8, 128>}, {pipeline_mode = #tpu.pipeline_mode<synchronous>, transform_indices = @transform_6, window_bounds = array<i64: 32, 128>}]} {
    %c0 = arith.constant 0 : index
    %c0_0 = arith.constant 0 : index
    %0 = vector.load %arg4[%c0, %c0_0] : memref<4x128xf32, #tpu.memory_space<vmem>>, vector<4x128xf32>
    %c0_1 = arith.constant 0 : index
    %c0_2 = arith.constant 0 : index
    %1 = vector.load %arg1[%c0_1, %c0_2] : memref<32x64xf32, #tpu.memory_space<vmem>>, vector<32x64xf32>
    %2 = tpu.iota {dimensions = array<i32: 0>} : vector<32x64xi32>
    %c16_i32 = arith.constant 16 : i32
    %c0_i32 = arith.constant 0 : i32
    %3 = arith.cmpi eq, %c16_i32, %c0_i32 : i32
    %c1_i32 = arith.constant 1 : i32
    %4 = arith.select %3, %c1_i32, %c16_i32 : i32
    %5 = vector.broadcast %4 : i32 to vector<32x64xi32>
    %6 = arith.remsi %2, %5 : vector<32x64xi32>
    %c0_i32_3 = arith.constant 0 : i32
    %7 = vector.broadcast %c0_i32_3 : i32 to vector<32x64xi32>
    %8 = arith.cmpi ne, %6, %7 : vector<32x64xi32>
    %c0_i32_4 = arith.constant 0 : i32
    %9 = vector.broadcast %c0_i32_4 : i32 to vector<32x64xi32>
    %10 = arith.cmpi slt, %6, %9 : vector<32x64xi32>
    %c0_i32_5 = arith.constant 0 : i32
    %11 = arith.cmpi slt, %4, %c0_i32_5 : i32
    %12 = vector.broadcast %11 : i1 to vector<32x64xi1>
    %13 = vector.broadcast %12 : vector<32x64xi1> to vector<32x64xi1>
    %14 = arith.xori %10, %13 : vector<32x64xi1>
    %15 = arith.andi %14, %8 : vector<32x64xi1>
    %16 = vector.broadcast %4 : i32 to vector<32x64xi32>
    %17 = arith.addi %6, %16 : vector<32x64xi32>
    %18 = arith.select %15, %17, %6 : vector<32x64xi1>, vector<32x64xi32>
    %c0_i32_6 = arith.constant 0 : i32
    %19 = vector.broadcast %c0_i32_6 : i32 to vector<32x64xi32>
    %20 = arith.cmpi ne, %18, %19 : vector<32x64xi32>
    %c1_i32_7 = arith.constant 1 : i32
    %21 = tpu.dynamic_rotate %1 by %c1_i32_7 dim 0 : vector<32x64xf32>, i32 -> vector<32x64xf32>
    %cst = arith.constant 0.000000e+00 : f32
    %22 = vector.broadcast %cst : f32 to vector<32x64xf32>
    %23 = arith.select %20, %21, %22 : vector<32x64xi1>, vector<32x64xf32>
    %c16_i32_8 = arith.constant 16 : i32
    %c0_i32_9 = arith.constant 0 : i32
    %24 = arith.cmpi eq, %c16_i32_8, %c0_i32_9 : i32
    %c1_i32_10 = arith.constant 1 : i32
    %25 = arith.select %24, %c1_i32_10, %c16_i32_8 : i32
    %26 = vector.broadcast %25 : i32 to vector<32x64xi32>
    %27 = arith.remsi %2, %26 : vector<32x64xi32>
    %c0_i32_11 = arith.constant 0 : i32
    %28 = vector.broadcast %c0_i32_11 : i32 to vector<32x64xi32>
    %29 = arith.cmpi ne, %27, %28 : vector<32x64xi32>
    %c0_i32_12 = arith.constant 0 : i32
    %30 = vector.broadcast %c0_i32_12 : i32 to vector<32x64xi32>
    %31 = arith.cmpi slt, %27, %30 : vector<32x64xi32>
    %c0_i32_13 = arith.constant 0 : i32
    %32 = arith.cmpi slt, %25, %c0_i32_13 : i32
    %33 = vector.broadcast %32 : i1 to vector<32x64xi1>
    %34 = vector.broadcast %33 : vector<32x64xi1> to vector<32x64xi1>
    %35 = arith.xori %31, %34 : vector<32x64xi1>
    %36 = arith.andi %35, %29 : vector<32x64xi1>
    %37 = vector.broadcast %25 : i32 to vector<32x64xi32>
    %38 = arith.addi %27, %37 : vector<32x64xi32>
    %39 = arith.select %36, %38, %27 : vector<32x64xi1>, vector<32x64xi32>
    %c15_i32 = arith.constant 15 : i32
    %40 = vector.broadcast %c15_i32 : i32 to vector<32x64xi32>
    %41 = arith.cmpi ne, %39, %40 : vector<32x64xi32>
    %c31_i32 = arith.constant 31 : i32
    %42 = tpu.dynamic_rotate %1 by %c31_i32 dim 0 : vector<32x64xf32>, i32 -> vector<32x64xf32>
    %cst_14 = arith.constant 0.000000e+00 : f32
    %43 = vector.broadcast %cst_14 : f32 to vector<32x64xf32>
    %44 = arith.select %41, %42, %43 : vector<32x64xi1>, vector<32x64xf32>
    %45 = arith.truncf %23 : vector<32x64xf32> to vector<32x64xbf16>
    %c0_15 = arith.constant 0 : index
    %c0_16 = arith.constant 0 : index
    %c0_17 = arith.constant 0 : index
    %46 = vector.load %arg2[%c0_15, %c0_16, %c0_17] : memref<3x64x128xbf16, #tpu.memory_space<vmem>>, vector<1x64x128xbf16>
    %47 = vector.shape_cast %46 : vector<1x64x128xbf16> to vector<64x128xbf16>
    %cst_18 = arith.constant dense<0.000000e+00> : vector<32x128xf32>
    %48 = tpu.matmul %45, %47, %cst_18 {dimension_numbers = #tpu.dot_dimension_numbers<[1], [0], [0], [1], [0, 0, 1, 1], [], []>} : vector<32x64xbf16>, vector<64x128xbf16>, vector<32x128xf32> -> vector<32x128xf32>
    %49 = arith.truncf %1 : vector<32x64xf32> to vector<32x64xbf16>
    %c1 = arith.constant 1 : index
    %c0_19 = arith.constant 0 : index
    %c0_20 = arith.constant 0 : index
    %50 = vector.load %arg2[%c1, %c0_19, %c0_20] : memref<3x64x128xbf16, #tpu.memory_space<vmem>>, vector<1x64x128xbf16>
    %51 = vector.shape_cast %50 : vector<1x64x128xbf16> to vector<64x128xbf16>
    %cst_21 = arith.constant dense<0.000000e+00> : vector<32x128xf32>
    %52 = tpu.matmul %49, %51, %cst_21 {dimension_numbers = #tpu.dot_dimension_numbers<[1], [0], [0], [1], [0, 0, 1, 1], [], []>} : vector<32x64xbf16>, vector<64x128xbf16>, vector<32x128xf32> -> vector<32x128xf32>
    %53 = arith.addf %48, %52 : vector<32x128xf32>
    %54 = arith.truncf %44 : vector<32x64xf32> to vector<32x64xbf16>
    %c2 = arith.constant 2 : index
    %c0_22 = arith.constant 0 : index
    %c0_23 = arith.constant 0 : index
    %55 = vector.load %arg2[%c2, %c0_22, %c0_23] : memref<3x64x128xbf16, #tpu.memory_space<vmem>>, vector<1x64x128xbf16>
    %56 = vector.shape_cast %55 : vector<1x64x128xbf16> to vector<64x128xbf16>
    %cst_24 = arith.constant dense<0.000000e+00> : vector<32x128xf32>
    %57 = tpu.matmul %54, %56, %cst_24 {dimension_numbers = #tpu.dot_dimension_numbers<[1], [0], [0], [1], [0, 0, 1, 1], [], []>} : vector<32x64xbf16>, vector<64x128xbf16>, vector<32x128xf32> -> vector<32x128xf32>
    %58 = arith.addf %53, %57 : vector<32x128xf32>
    %59 = vector.extract_strided_slice %0 {offsets = [0, 0], sizes = [1, 128], strides = [1, 1]} : vector<4x128xf32> to vector<1x128xf32>
    %60 = vector.extract_strided_slice %0 {offsets = [1, 0], sizes = [1, 128], strides = [1, 1]} : vector<4x128xf32> to vector<1x128xf32>
    %61 = arith.mulf %58, %58 : vector<32x128xf32>
    %62 = tpu.concatenate %58, %61 in 0 : vector<32x128xf32>, vector<32x128xf32> -> vector<64x128xf32>
    %c0_25 = arith.constant 0 : index
    %c0_26 = arith.constant 0 : index
    %63 = vector.load %arg5[%c0_25, %c0_26] : memref<128x8xf32, #tpu.memory_space<vmem>>, vector<128x8xf32>
    %cst_27 = arith.constant dense<0.000000e+00> : vector<64x8xf32>
    %64 = tpu.matmul %62, %63, %cst_27 {dimension_numbers = #tpu.dot_dimension_numbers<[1], [0], [0], [1], [0, 0, 1, 1], [], []>} : vector<64x128xf32>, vector<128x8xf32>, vector<64x8xf32> -> vector<64x8xf32>
    %65 = vector.extract_strided_slice %64 {offsets = [0, 0], sizes = [32, 8], strides = [1, 1]} : vector<64x8xf32> to vector<32x8xf32>
    %cst_28 = arith.constant dense<0.000000e+00> : vector<8xf32>
    %66 = vector.multi_reduction <add>, %65, %cst_28 [0] : vector<32x8xf32> to vector<8xf32>
    %67 = vector.shape_cast %66 : vector<8xf32> to vector<1x8xf32>
    %cst_29 = arith.constant 0.001953125 : f32
    %68 = vector.broadcast %cst_29 : f32 to vector<1x8xf32>
    %69 = arith.mulf %67, %68 : vector<1x8xf32>
    %70 = vector.extract_strided_slice %64 {offsets = [32, 0], sizes = [32, 8], strides = [1, 1]} : vector<64x8xf32> to vector<32x8xf32>
    %cst_30 = arith.constant dense<0.000000e+00> : vector<8xf32>
    %71 = vector.multi_reduction <add>, %70, %cst_30 [0] : vector<32x8xf32> to vector<8xf32>
    %72 = vector.shape_cast %71 : vector<8xf32> to vector<1x8xf32>
    %cst_31 = arith.constant 0.001953125 : f32
    %73 = vector.broadcast %cst_31 : f32 to vector<1x8xf32>
    %74 = arith.mulf %72, %73 : vector<1x8xf32>
    %75 = tpu.concatenate %69, %74 in 0 : vector<1x8xf32>, vector<1x8xf32> -> vector<2x8xf32>
    %c0_32 = arith.constant 0 : index
    %c0_33 = arith.constant 0 : index
    %76 = vector.load %arg6[%c0_32, %c0_33] : memref<8x128xf32, #tpu.memory_space<vmem>>, vector<8x128xf32>
    %cst_34 = arith.constant dense<0.000000e+00> : vector<2x128xf32>
    %77 = tpu.matmul %75, %76, %cst_34 {dimension_numbers = #tpu.dot_dimension_numbers<[1], [0], [0], [1], [0, 0, 1, 1], [], []>} : vector<2x8xf32>, vector<8x128xf32>, vector<2x128xf32> -> vector<2x128xf32>
    %78 = vector.extract_strided_slice %77 {offsets = [0, 0], sizes = [1, 128], strides = [1, 1]} : vector<2x128xf32> to vector<1x128xf32>
    %79 = vector.extract_strided_slice %77 {offsets = [1, 0], sizes = [1, 128], strides = [1, 1]} : vector<2x128xf32> to vector<1x128xf32>
    %80 = arith.mulf %78, %78 : vector<1x128xf32>
    %81 = arith.subf %79, %80 : vector<1x128xf32>
    %cst_35 = arith.constant 9.99999974E-6 : f32
    %82 = vector.broadcast %cst_35 : f32 to vector<1x128xf32>
    %83 = arith.addf %81, %82 : vector<1x128xf32>
    %84 = math.rsqrt %83 : vector<1x128xf32>
    %85 = arith.mulf %59, %84 : vector<1x128xf32>
    %86 = arith.mulf %78, %85 : vector<1x128xf32>
    %87 = arith.subf %60, %86 : vector<1x128xf32>
    %88 = vector.broadcast %85 : vector<1x128xf32> to vector<32x128xf32>
    %89 = arith.mulf %58, %88 : vector<32x128xf32>
    %90 = vector.broadcast %87 : vector<1x128xf32> to vector<32x128xf32>
    %91 = arith.addf %89, %90 : vector<32x128xf32>
    %cst_36 = arith.constant 0.000000e+00 : f32
    %92 = vector.broadcast %cst_36 : f32 to vector<32x128xf32>
    %93 = arith.maximumf %91, %92 : vector<32x128xf32>
    %94 = tpu.iota {dimensions = array<i32: 0>} : vector<32x128xi32>
    %c16_i32_37 = arith.constant 16 : i32
    %c0_i32_38 = arith.constant 0 : i32
    %95 = arith.cmpi eq, %c16_i32_37, %c0_i32_38 : i32
    %c1_i32_39 = arith.constant 1 : i32
    %96 = arith.select %95, %c1_i32_39, %c16_i32_37 : i32
    %97 = vector.broadcast %96 : i32 to vector<32x128xi32>
    %98 = arith.remsi %94, %97 : vector<32x128xi32>
    %c0_i32_40 = arith.constant 0 : i32
    %99 = vector.broadcast %c0_i32_40 : i32 to vector<32x128xi32>
    %100 = arith.cmpi ne, %98, %99 : vector<32x128xi32>
    %c0_i32_41 = arith.constant 0 : i32
    %101 = vector.broadcast %c0_i32_41 : i32 to vector<32x128xi32>
    %102 = arith.cmpi slt, %98, %101 : vector<32x128xi32>
    %c0_i32_42 = arith.constant 0 : i32
    %103 = arith.cmpi slt, %96, %c0_i32_42 : i32
    %104 = vector.broadcast %103 : i1 to vector<32x128xi1>
    %105 = vector.broadcast %104 : vector<32x128xi1> to vector<32x128xi1>
    %106 = arith.xori %102, %105 : vector<32x128xi1>
    %107 = arith.andi %106, %100 : vector<32x128xi1>
    %108 = vector.broadcast %96 : i32 to vector<32x128xi32>
    %109 = arith.addi %98, %108 : vector<32x128xi32>
    %110 = arith.select %107, %109, %98 : vector<32x128xi1>, vector<32x128xi32>
    %c0_i32_43 = arith.constant 0 : i32
    %111 = vector.broadcast %c0_i32_43 : i32 to vector<32x128xi32>
    %112 = arith.cmpi ne, %110, %111 : vector<32x128xi32>
    %c1_i32_44 = arith.constant 1 : i32
    %113 = tpu.dynamic_rotate %93 by %c1_i32_44 dim 0 : vector<32x128xf32>, i32 -> vector<32x128xf32>
    %cst_45 = arith.constant 0.000000e+00 : f32
    %114 = vector.broadcast %cst_45 : f32 to vector<32x128xf32>
    %115 = arith.select %112, %113, %114 : vector<32x128xi1>, vector<32x128xf32>
    %c16_i32_46 = arith.constant 16 : i32
    %c0_i32_47 = arith.constant 0 : i32
    %116 = arith.cmpi eq, %c16_i32_46, %c0_i32_47 : i32
    %c1_i32_48 = arith.constant 1 : i32
    %117 = arith.select %116, %c1_i32_48, %c16_i32_46 : i32
    %118 = vector.broadcast %117 : i32 to vector<32x128xi32>
    %119 = arith.remsi %94, %118 : vector<32x128xi32>
    %c0_i32_49 = arith.constant 0 : i32
    %120 = vector.broadcast %c0_i32_49 : i32 to vector<32x128xi32>
    %121 = arith.cmpi ne, %119, %120 : vector<32x128xi32>
    %c0_i32_50 = arith.constant 0 : i32
    %122 = vector.broadcast %c0_i32_50 : i32 to vector<32x128xi32>
    %123 = arith.cmpi slt, %119, %122 : vector<32x128xi32>
    %c0_i32_51 = arith.constant 0 : i32
    %124 = arith.cmpi slt, %117, %c0_i32_51 : i32
    %125 = vector.broadcast %124 : i1 to vector<32x128xi1>
    %126 = vector.broadcast %125 : vector<32x128xi1> to vector<32x128xi1>
    %127 = arith.xori %123, %126 : vector<32x128xi1>
    %128 = arith.andi %127, %121 : vector<32x128xi1>
    %129 = vector.broadcast %117 : i32 to vector<32x128xi32>
    %130 = arith.addi %119, %129 : vector<32x128xi32>
    %131 = arith.select %128, %130, %119 : vector<32x128xi1>, vector<32x128xi32>
    %c15_i32_52 = arith.constant 15 : i32
    %132 = vector.broadcast %c15_i32_52 : i32 to vector<32x128xi32>
    %133 = arith.cmpi ne, %131, %132 : vector<32x128xi32>
    %c31_i32_53 = arith.constant 31 : i32
    %134 = tpu.dynamic_rotate %93 by %c31_i32_53 dim 0 : vector<32x128xf32>, i32 -> vector<32x128xf32>
    %cst_54 = arith.constant 0.000000e+00 : f32
    %135 = vector.broadcast %cst_54 : f32 to vector<32x128xf32>
    %136 = arith.select %133, %134, %135 : vector<32x128xi1>, vector<32x128xf32>
    %137 = arith.truncf %115 : vector<32x128xf32> to vector<32x128xbf16>
    %c0_55 = arith.constant 0 : index
    %c0_56 = arith.constant 0 : index
    %c0_57 = arith.constant 0 : index
    %138 = vector.load %arg3[%c0_55, %c0_56, %c0_57] : memref<3x128x128xbf16, #tpu.memory_space<vmem>>, vector<1x128x128xbf16>
    %139 = vector.shape_cast %138 : vector<1x128x128xbf16> to vector<128x128xbf16>
    %cst_58 = arith.constant dense<0.000000e+00> : vector<32x128xf32>
    %140 = tpu.matmul %137, %139, %cst_58 {dimension_numbers = #tpu.dot_dimension_numbers<[1], [0], [0], [1], [0, 0, 1, 1], [], []>} : vector<32x128xbf16>, vector<128x128xbf16>, vector<32x128xf32> -> vector<32x128xf32>
    %141 = arith.truncf %93 : vector<32x128xf32> to vector<32x128xbf16>
    %c1_59 = arith.constant 1 : index
    %c0_60 = arith.constant 0 : index
    %c0_61 = arith.constant 0 : index
    %142 = vector.load %arg3[%c1_59, %c0_60, %c0_61] : memref<3x128x128xbf16, #tpu.memory_space<vmem>>, vector<1x128x128xbf16>
    %143 = vector.shape_cast %142 : vector<1x128x128xbf16> to vector<128x128xbf16>
    %cst_62 = arith.constant dense<0.000000e+00> : vector<32x128xf32>
    %144 = tpu.matmul %141, %143, %cst_62 {dimension_numbers = #tpu.dot_dimension_numbers<[1], [0], [0], [1], [0, 0, 1, 1], [], []>} : vector<32x128xbf16>, vector<128x128xbf16>, vector<32x128xf32> -> vector<32x128xf32>
    %145 = arith.addf %140, %144 : vector<32x128xf32>
    %146 = arith.truncf %136 : vector<32x128xf32> to vector<32x128xbf16>
    %c2_63 = arith.constant 2 : index
    %c0_64 = arith.constant 0 : index
    %c0_65 = arith.constant 0 : index
    %147 = vector.load %arg3[%c2_63, %c0_64, %c0_65] : memref<3x128x128xbf16, #tpu.memory_space<vmem>>, vector<1x128x128xbf16>
    %148 = vector.shape_cast %147 : vector<1x128x128xbf16> to vector<128x128xbf16>
    %cst_66 = arith.constant dense<0.000000e+00> : vector<32x128xf32>
    %149 = tpu.matmul %146, %148, %cst_66 {dimension_numbers = #tpu.dot_dimension_numbers<[1], [0], [0], [1], [0, 0, 1, 1], [], []>} : vector<32x128xbf16>, vector<128x128xbf16>, vector<32x128xf32> -> vector<32x128xf32>
    %150 = arith.addf %145, %149 : vector<32x128xf32>
    %151 = vector.extract_strided_slice %0 {offsets = [2, 0], sizes = [1, 128], strides = [1, 1]} : vector<4x128xf32> to vector<1x128xf32>
    %152 = vector.extract_strided_slice %0 {offsets = [3, 0], sizes = [1, 128], strides = [1, 1]} : vector<4x128xf32> to vector<1x128xf32>
    %153 = arith.mulf %150, %150 : vector<32x128xf32>
    %154 = tpu.concatenate %150, %153 in 0 : vector<32x128xf32>, vector<32x128xf32> -> vector<64x128xf32>
    %c0_67 = arith.constant 0 : index
    %c0_68 = arith.constant 0 : index
    %155 = vector.load %arg5[%c0_67, %c0_68] : memref<128x8xf32, #tpu.memory_space<vmem>>, vector<128x8xf32>
    %cst_69 = arith.constant dense<0.000000e+00> : vector<64x8xf32>
    %156 = tpu.matmul %154, %155, %cst_69 {dimension_numbers = #tpu.dot_dimension_numbers<[1], [0], [0], [1], [0, 0, 1, 1], [], []>} : vector<64x128xf32>, vector<128x8xf32>, vector<64x8xf32> -> vector<64x8xf32>
    %157 = vector.extract_strided_slice %156 {offsets = [0, 0], sizes = [32, 8], strides = [1, 1]} : vector<64x8xf32> to vector<32x8xf32>
    %cst_70 = arith.constant dense<0.000000e+00> : vector<8xf32>
    %158 = vector.multi_reduction <add>, %157, %cst_70 [0] : vector<32x8xf32> to vector<8xf32>
    %159 = vector.shape_cast %158 : vector<8xf32> to vector<1x8xf32>
    %cst_71 = arith.constant 0.001953125 : f32
    %160 = vector.broadcast %cst_71 : f32 to vector<1x8xf32>
    %161 = arith.mulf %159, %160 : vector<1x8xf32>
    %162 = vector.extract_strided_slice %156 {offsets = [32, 0], sizes = [32, 8], strides = [1, 1]} : vector<64x8xf32> to vector<32x8xf32>
    %cst_72 = arith.constant dense<0.000000e+00> : vector<8xf32>
    %163 = vector.multi_reduction <add>, %162, %cst_72 [0] : vector<32x8xf32> to vector<8xf32>
    %164 = vector.shape_cast %163 : vector<8xf32> to vector<1x8xf32>
    %cst_73 = arith.constant 0.001953125 : f32
    %165 = vector.broadcast %cst_73 : f32 to vector<1x8xf32>
    %166 = arith.mulf %164, %165 : vector<1x8xf32>
    %167 = tpu.concatenate %161, %166 in 0 : vector<1x8xf32>, vector<1x8xf32> -> vector<2x8xf32>
    %c0_74 = arith.constant 0 : index
    %c0_75 = arith.constant 0 : index
    %168 = vector.load %arg6[%c0_74, %c0_75] : memref<8x128xf32, #tpu.memory_space<vmem>>, vector<8x128xf32>
    %cst_76 = arith.constant dense<0.000000e+00> : vector<2x128xf32>
    %169 = tpu.matmul %167, %168, %cst_76 {dimension_numbers = #tpu.dot_dimension_numbers<[1], [0], [0], [1], [0, 0, 1, 1], [], []>} : vector<2x8xf32>, vector<8x128xf32>, vector<2x128xf32> -> vector<2x128xf32>
    %170 = vector.extract_strided_slice %169 {offsets = [0, 0], sizes = [1, 128], strides = [1, 1]} : vector<2x128xf32> to vector<1x128xf32>
    %171 = vector.extract_strided_slice %169 {offsets = [1, 0], sizes = [1, 128], strides = [1, 1]} : vector<2x128xf32> to vector<1x128xf32>
    %172 = arith.mulf %170, %170 : vector<1x128xf32>
    %173 = arith.subf %171, %172 : vector<1x128xf32>
    %cst_77 = arith.constant 9.99999974E-6 : f32
    %174 = vector.broadcast %cst_77 : f32 to vector<1x128xf32>
    %175 = arith.addf %173, %174 : vector<1x128xf32>
    %176 = math.rsqrt %175 : vector<1x128xf32>
    %177 = arith.mulf %151, %176 : vector<1x128xf32>
    %178 = arith.mulf %170, %177 : vector<1x128xf32>
    %179 = arith.subf %152, %178 : vector<1x128xf32>
    %180 = vector.broadcast %177 : vector<1x128xf32> to vector<32x128xf32>
    %181 = arith.mulf %150, %180 : vector<32x128xf32>
    %182 = vector.broadcast %179 : vector<1x128xf32> to vector<32x128xf32>
    %183 = arith.addf %181, %182 : vector<32x128xf32>
    %cst_78 = arith.constant 0.000000e+00 : f32
    %184 = vector.broadcast %cst_78 : f32 to vector<32x128xf32>
    %185 = arith.maximumf %183, %184 : vector<32x128xf32>
    %c0_79 = arith.constant 0 : index
    %c0_80 = arith.constant 0 : index
    %186 = vector.load %arg7[%c0_79, %c0_80] : memref<32x128xf32, #tpu.memory_space<vmem>>, vector<32x128xf32>
    tpu.vector_store %arg7[%c0_79, %c0_80], %185 {strides = array<i32>} : memref<32x128xf32, #tpu.memory_space<vmem>>, vector<32x128xf32>,
    return
  }
  func.func @transform_0(%arg0: i32) -> (i32, i32) {
    %c0_i32 = arith.constant 0 : i32
    %c0_i32_0 = arith.constant 0 : i32
    %c0_i32_1 = arith.constant 0 : i32
    return %c0_i32, %c0_i32_0 : i32, i32
  }
  func.func @transform_1(%arg0: i32) -> (i32, i32, i32) {
    %c0_i32 = arith.constant 0 : i32
    %c0_i32_0 = arith.constant 0 : i32
    %c0_i32_1 = arith.constant 0 : i32
    %c0_i32_2 = arith.constant 0 : i32
    return %c0_i32, %c0_i32_0, %c0_i32_1 : i32, i32, i32
  }
  func.func @transform_2(%arg0: i32) -> (i32, i32, i32) {
    %c0_i32 = arith.constant 0 : i32
    %c0_i32_0 = arith.constant 0 : i32
    %c0_i32_1 = arith.constant 0 : i32
    %c0_i32_2 = arith.constant 0 : i32
    return %c0_i32, %c0_i32_0, %c0_i32_1 : i32, i32, i32
  }
  func.func @transform_3(%arg0: i32) -> (i32, i32) {
    %c0_i32 = arith.constant 0 : i32
    %c0_i32_0 = arith.constant 0 : i32
    %c0_i32_1 = arith.constant 0 : i32
    return %c0_i32, %c0_i32_0 : i32, i32
  }
  func.func @transform_4(%arg0: i32) -> (i32, i32) {
    %c0_i32 = arith.constant 0 : i32
    %c0_i32_0 = arith.constant 0 : i32
    %c0_i32_1 = arith.constant 0 : i32
    return %c0_i32, %c0_i32_0 : i32, i32
  }
  func.func @transform_5(%arg0: i32) -> (i32, i32) {
    %c0_i32 = arith.constant 0 : i32
    %c0_i32_0 = arith.constant 0 : i32
    %c0_i32_1 = arith.constant 0 : i32
    return %c0_i32, %c0_i32_0 : i32, i32
  }
  func.func @transform_6(%arg0: i32) -> (i32, i32) {
    %c0_i32 = arith.constant 0 : i32
    %c0_i32_0 = arith.constant 0 : i32
    %c0_i32_1 = arith.constant 0 : i32
    return %c0_i32, %c0_i32_0 : i32, i32
  }
}

</mosaic_0001>

<llo_original>
// kernel: tile.39
$region0: #{tile.39}
  %s0 = inlined_call_operand.vmem [shape: f32[8,16,8], index: 0, kind: input, shape index: {}]
  %s1 = inlined_call_operand.vmem [shape: f32[8,128], index: 1, kind: output, shape index: {}]
  %s2 = smov 3
  %v3 = vld [vmem:[%s0] ss:$16 sm:%s2]
  %s4 = smov 12
  %v5 = vld [vmem:[%s0] ss:$16 sm:%s4]
  %vm6 = vcmask 1043458
  %v7 = vsel %vm6, %v5, %v3
  %s8 = smov 48
  %v9 = vld [vmem:[%s0] ss:$16 sm:%s8]
  %vm10 = vcmask 1045508
  %v11 = vsel %vm10, %v9, %v7
  %s12 = smov 192
  %v13 = vld [vmem:[%s0] ss:$16 sm:%s12]
  %vm14 = vcmask 1047558
  %v15 = vsel %vm14, %v13, %v11
  %vm16 = vcmask 64512
  %17 = vst.msk [vmem:[%s1] sm:$0xff] %vm16, %v15
  %s18 = scalar_lea.vmem %s0, 15
  %s19 = smov 3
  %v20 = vld [vmem:[%s18] ss:$16 sm:%s19]
  %s21 = scalar_lea.vmem %s0, 15
  %s22 = smov 12
  %v23 = vld [vmem:[%s21] ss:$16 sm:%s22]
  %vm24 = vcmask 1043458
  %v25 = vsel %vm24, %v23, %v20
  %s26 = scalar_lea.vmem %s0, 15
  %s27 = smov 48
  %v28 = vld [vmem:[%s26] ss:$16 sm:%s27]
  %vm29 = vcmask 1045508
  %v30 = vsel %vm29, %v28, %v25
  %s31 = scalar_lea.vmem %s0, 15
  %s32 = smov 192
  %v33 = vld [vmem:[%s31] ss:$16 sm:%s32]
  %vm34 = vcmask 1047558
  %v35 = vsel %vm34, %v33, %v30
  %36 = vrot.lane.b32.xlu0 %v35, 120
  %v37 = vpop.permute.xlu0 %36
  %vm38 = vcmask 1048512
  %39 = vst.msk [vmem:[%s1] sm:$0xff] %vm38, %v37
  %s40 = scalar_lea.vmem %s0, 14
  %s41 = smov 3
  %v42 = vld [vmem:[%s40] ss:$16 sm:%s41]
  %s43 = scalar_lea.vmem %s0, 14
  %s44 = smov 12
  %v45 = vld [vmem:[%s43] ss:$16 sm:%s44]
  %vm46 = vcmask 1043458
  %v47 = vsel %vm46, %v45, %v42
  %s48 = scalar_lea.vmem %s0, 14
  %s49 = smov 48
  %v50 = vld [vmem:[%s48] ss:$16 sm:%s49]
  %vm51 = vcmask 1045508
  %v52 = vsel %vm51, %v50, %v47
  %s53 = scalar_lea.vmem %s0, 14
  %s54 = smov 192
  %v55 = vld [vmem:[%s53] ss:$16 sm:%s54]
  %vm56 = vcmask 1047558
  %v57 = vsel %vm56, %v55, %v52
  %58 = vrot.lane.b32.xlu0 %v57, 112
  %v59 = vpop.permute.xlu0 %58
  %vm60 = vcmask 982912
  %61 = vst.msk [vmem:[%s1] sm:$0xff] %vm60, %v59
  %s62 = scalar_lea.vmem %s0, 13
  %s63 = smov 3
  %v64 = vld [vmem:[%s62] ss:$16 sm:%s63]
  %s65 = scalar_lea.vmem %s0, 13
  %s66 = smov 12
  %v67 = vld [vmem:[%s65] ss:$16 sm:%s66]
  %vm68 = vcmask 1043458
  %v69 = vsel %vm68, %v67, %v64
  %s70 = scalar_lea.vmem %s0, 13
  %s71 = smov 48
  %v72 = vld [vmem:[%s70] ss:$16 sm:%s71]
  %vm73 = vcmask 1045508
  %v74 = vsel %vm73, %v72, %v69
  %s75 = scalar_lea.vmem %s0, 13
  %s76 = smov 192
  %v77 = vld [vmem:[%s75] ss:$16 sm:%s76]
  %vm78 = vcmask 1047558
  %v79 = vsel %vm78, %v77, %v74
  %80 = vrot.lane.b32.xlu0 %v79, 104
  %v81 = vpop.permute.xlu0 %80
  %vm82 = vcmask 917312
  %83 = vst.msk [vmem:[%s1] sm:$0xff] %vm82, %v81
  %s84 = scalar_lea.vmem %s0, 12
  %s85 = smov 3
  %v86 = vld [vmem:[%s84] ss:$16 sm:%s85]
  %s87 = scalar_lea.vmem %s0, 12
  %s88 = smov 12
  %v89 = vld [vmem:[%s87] ss:$16 sm:%s88]
  %vm90 = vcmask 1043458
  %v91 = vsel %vm90, %v89, %v86
  %s92 = scalar_lea.vmem %s0, 12
  %s93 = smov 48
  %v94 = vld [vmem:[%s92] ss:$16 sm:%s93]
  %vm95 = vcmask 1045508
  %v96 = vsel %vm95, %v94, %v91
  %s97 = scalar_lea.vmem %s0, 12
  %s98 = smov 192
  %v99 = vld [vmem:[%s97] ss:$16 sm:%s98]
  %vm100 = vcmask 1047558
  %v101 = vsel %vm100, %v99, %v96
  %102 = vrot.lane.b32.xlu0 %v101, 96
  %v103 = vpop.permute.xlu0 %102
  %vm104 = vcmask 851712
  %105 = vst.msk [vmem:[%s1] sm:$0xff] %vm104, %v103
  %s106 = scalar_lea.vmem %s0, 11
  %s107 = smov 3
  %v108 = vld [vmem:[%s106] ss:$16 sm:%s107]
  %s109 = scalar_lea.vmem %s0, 11
  %s110 = smov 12
  %v111 = vld [vmem:[%s109] ss:$16 sm:%s110]
  %vm112 = vcmask 1043458
  %v113 = vsel %vm112, %v111, %v108
  %s114 = scalar_lea.vmem %s0, 11
  %s115 = smov 48
  %v116 = vld [vmem:[%s114] ss:$16 sm:%s115]
  %vm117 = vcmask 1045508
  %v118 = vsel %vm117, %v116, %v113
  %s119 = scalar_lea.vmem %s0, 11
  %s120 = smov 192
  %v121 = vld [vmem:[%s119] ss:$16 sm:%s120]
  %vm122 = vcmask 1047558
  %v123 = vsel %vm122, %v121, %v118
  %124 = vrot.lane.b32.xlu0 %v123, 88
  %v125 = vpop.permute.xlu0 %124
  %vm126 = vcmask 786112
  %127 = vst.msk [vmem:[%s1] sm:$0xff] %vm126, %v125
  %s128 = scalar_lea.vmem %s0, 10
  %s129 = smov 3
  %v130 = vld [vmem:[%s128] ss:$16 sm:%s129]
  %s131 = scalar_lea.vmem %s0, 10
  %s132 = smov 12
  %v133 = vld [vmem:[%s131] ss:$16 sm:%s132]
  %vm134 = vcmask 1043458
  %v135 = vsel %vm134, %v133, %v130
  %s136 = scalar_lea.vmem %s0, 10
  %s137 = smov 48
  %v138 = vld [vmem:[%s136] ss:$16 sm:%s137]
  %vm139 = vcmask 1045508
  %v140 = vsel %vm139, %v138, %v135
  %s141 = scalar_lea.vmem %s0, 10
  %s142 = smov 192
  %v143 = vld [vmem:[%s141] ss:$16 sm:%s142]
  %vm144 = vcmask 1047558
  %v145 = vsel %vm144, %v143, %v140
  %146 = vrot.lane.b32.xlu0 %v145, 80
  %v147 = vpop.permute.xlu0 %146
  %vm148 = vcmask 720512
  %149 = vst.msk [vmem:[%s1] sm:$0xff] %vm148, %v147
  %s150 = scalar_lea.vmem %s0, 9
  %s151 = smov 3
  %v152 = vld [vmem:[%s150] ss:$16 sm:%s151]
  %s153 = scalar_lea.vmem %s0, 9
  %s154 = smov 12
  %v155 = vld [vmem:[%s153] ss:$16 sm:%s154]
  %vm156 = vcmask 1043458
  %v157 = vsel %vm156, %v155, %v152
  %s158 = scalar_lea.vmem %s0, 9
  %s159 = smov 48
  %v160 = vld [vmem:[%s158] ss:$16 sm:%s159]
  %vm161 = vcmask 1045508
  %v162 = vsel %vm161, %v160, %v157
  %s163 = scalar_lea.vmem %s0, 9
  %s164 = smov 192
  %v165 = vld [vmem:[%s163] ss:$16 sm:%s164]
  %vm166 = vcmask 1047558
  %v167 = vsel %vm166, %v165, %v162
  %168 = vrot.lane.b32.xlu0 %v167, 72
  %v169 = vpop.permute.xlu0 %168
  %vm170 = vcmask 654912
  %171 = vst.msk [vmem:[%s1] sm:$0xff] %vm170, %v169
  %s172 = scalar_lea.vmem %s0, 8
  %s173 = smov 3
  %v174 = vld [vmem:[%s172] ss:$16 sm:%s173]
  %s175 = scalar_lea.vmem %s0, 8
  %s176 = smov 12
  %v177 = vld [vmem:[%s175] ss:$16 sm:%s176]
  %vm178 = vcmask 1043458
  %v179 = vsel %vm178, %v177, %v174
  %s180 = scalar_lea.vmem %s0, 8
  %s181 = smov 48
  %v182 = vld [vmem:[%s180] ss:$16 sm:%s181]
  %vm183 = vcmask 1045508
  %v184 = vsel %vm183, %v182, %v179
  %s185 = scalar_lea.vmem %s0, 8
  %s186 = smov 192
  %v187 = vld [vmem:[%s185] ss:$16 sm:%s186]
  %vm188 = vcmask 1047558
  %v189 = vsel %vm188, %v187, %v184
  %190 = vrot.lane.b32.xlu0 %v189, 64
  %v191 = vpop.permute.xlu0 %190
  %vm192 = vcmask 589312
  %193 = vst.msk [vmem:[%s1] sm:$0xff] %vm192, %v191
  %s194 = scalar_lea.vmem %s0, 7
  %s195 = smov 3
  %v196 = vld [vmem:[%s194] ss:$16 sm:%s195]
  %s197 = scalar_lea.vmem %s0, 7
  %s198 = smov 12
  %v199 = vld [vmem:[%s197] ss:$16 sm:%s198]
  %vm200 = vcmask 1043458
  %v201 = vsel %vm200, %v199, %v196
  %s202 = scalar_lea.vmem %s0, 7
  %s203 = smov 48
  %v204 = vld [vmem:[%s202] ss:$16 sm:%s203]
  %vm205 = vcmask 1045508
  %v206 = vsel %vm205, %v204, %v201
  %s207 = scalar_lea.vmem %s0, 7
  %s208 = smov 192
  %v209 = vld [vmem:[%s207] ss:$16 sm:%s208]
  %vm210 = vcmask 1047558
  %v211 = vsel %vm210, %v209, %v206
  %212 = vrot.lane.b32.xlu0 %v211, 56
  %v213 = vpop.permute.xlu0 %212
  %vm214 = vcmask 523712
  %215 = vst.msk [vmem:[%s1] sm:$0xff] %vm214, %v213
  %s216 = scalar_lea.vmem %s0, 6
  %s217 = smov 3
  %v218 = vld [vmem:[%s216] ss:$16 sm:%s217]
  %s219 = scalar_lea.vmem %s0, 6
  %s220 = smov 12
  %v221 = vld [vmem:[%s219] ss:$16 sm:%s220]
  %vm222 = vcmask 1043458
  %v223 = vsel %vm222, %v221, %v218
  %s224 = scalar_lea.vmem %s0, 6
  %s225 = smov 48
  %v226 = vld [vmem:[%s224] ss:$16 sm:%s225]
  %vm227 = vcmask 1045508
  %v228 = vsel %vm227, %v226, %v223
  %s229 = scalar_lea.vmem %s0, 6
  %s230 = smov 192
  %v231 = vld [vmem:[%s229] ss:$16 sm:%s230]
  %vm232 = vcmask 1047558
  %v233 = vsel %vm232, %v231, %v228
  %234 = vrot.lane.b32.xlu0 %v233, 48
  %v235 = vpop.permute.xlu0 %234
  %vm236 = vcmask 458112
  %237 = vst.msk [vmem:[%s1] sm:$0xff] %vm236, %v235
  %s238 = scalar_lea.vmem %s0, 5
  %s239 = smov 3
  %v240 = vld [vmem:[%s238] ss:$16 sm:%s239]
  %s241 = scalar_lea.vmem %s0, 5
  %s242 = smov 12
  %v243 = vld [vmem:[%s241] ss:$16 sm:%s242]
  %vm244 = vcmask 1043458
  %v245 = vsel %vm244, %v243, %v240
  %s246 = scalar_lea.vmem %s0, 5
  %s247 = smov 48
  %v248 = vld [vmem:[%s246] ss:$16 sm:%s247]
  %vm249 = vcmask 1045508
  %v250 = vsel %vm249, %v248, %v245
  %s251 = scalar_lea.vmem %s0, 5
  %s252 = smov 192
  %v253 = vld [vmem:[%s251] ss:$16 sm:%s252]
  %vm254 = vcmask 1047558
  %v255 = vsel %vm254, %v253, %v250
  %256 = vrot.lane.b32.xlu0 %v255, 40
  %v257 = vpop.permute.xlu0 %256
  %vm258 = vcmask 392512
  %259 = vst.msk [vmem:[%s1] sm:$0xff] %vm258, %v257
  %s260 = scalar_lea.vmem %s0, 4
  %s261 = smov 3
  %v262 = vld [vmem:[%s260] ss:$16 sm:%s261]
  %s263 = scalar_lea.vmem %s0, 4
  %s264 = smov 12
  %v265 = vld [vmem:[%s263] ss:$16 sm:%s264]
  %vm266 = vcmask 1043458
  %v267 = vsel %vm266, %v265, %v262
  %s268 = scalar_lea.vmem %s0, 4
  %s269 = smov 48
  %v270 = vld [vmem:[%s268] ss:$16 sm:%s269]
  %vm271 = vcmask 1045508
  %v272 = vsel %vm271, %v270, %v267
  %s273 = scalar_lea.vmem %s0, 4
  %s274 = smov 192
  %v275 = vld [vmem:[%s273] ss:$16 sm:%s274]
  %vm276 = vcmask 1047558
  %v277 = vsel %vm276, %v275, %v272
  %278 = vrot.lane.b32.xlu0 %v277, 32
  %v279 = vpop.permute.xlu0 %278
  %vm280 = vcmask 326912
  %281 = vst.msk [vmem:[%s1] sm:$0xff] %vm280, %v279
  %s282 = scalar_lea.vmem %s0, 3
  %s283 = smov 3
  %v284 = vld [vmem:[%s282] ss:$16 sm:%s283]
  %s285 = scalar_lea.vmem %s0, 3
  %s286 = smov 12
  %v287 = vld [vmem:[%s285] ss:$16 sm:%s286]
  %vm288 = vcmask 1043458
  %v289 = vsel %vm288, %v287, %v284
  %s290 = scalar_lea.vmem %s0, 3
  %s291 = smov 48
  %v292 = vld [vmem:[%s290] ss:$16 sm:%s291]
  %vm293 = vcmask 1045508
  %v294 = vsel %vm293, %v292, %v289
  %s295 = scalar_lea.vmem %s0, 3
  %s296 = smov 192
  %v297 = vld [vmem:[%s295] ss:$16 sm:%s296]
  %vm298 = vcmask 1047558
  %v299 = vsel %vm298, %v297, %v294
  %300 = vrot.lane.b32.xlu0 %v299, 24
  %v301 = vpop.permute.xlu0 %300
  %vm302 = vcmask 261312
  %303 = vst.msk [vmem:[%s1] sm:$0xff] %vm302, %v301
  %s304 = scalar_lea.vmem %s0, 2
  %s305 = smov 3
  %v306 = vld [vmem:[%s304] ss:$16 sm:%s305]
  %s307 = scalar_lea.vmem %s0, 2
  %s308 = smov 12
  %v309 = vld [vmem:[%s307] ss:$16 sm:%s308]
  %vm310 = vcmask 1043458
  %v311 = vsel %vm310, %v309, %v306
  %s312 = scalar_lea.vmem %s0, 2
  %s313 = smov 48
  %v314 = vld [vmem:[%s312] ss:$16 sm:%s313]
  %vm315 = vcmask 1045508
  %v316 = vsel %vm315, %v314, %v311
  %s317 = scalar_lea.vmem %s0, 2
  %s318 = smov 192
  %v319 = vld [vmem:[%s317] ss:$16 sm:%s318]
  %vm320 = vcmask 1047558
  %v321 = vsel %vm320, %v319, %v316
  %322 = vrot.lane.b32.xlu0 %v321, 16
  %v323 = vpop.permute.xlu0 %322
  %vm324 = vcmask 195712
  %325 = vst.msk [vmem:[%s1] sm:$0xff] %vm324, %v323
  %s326 = scalar_lea.vmem %s0, 1
  %s327 = smov 3
  %v328 = vld [vmem:[%s326] ss:$16 sm:%s327]
  %s329 = scalar_lea.vmem %s0, 1
  %s330 = smov 12
  %v331 = vld [vmem:[%s329] ss:$16 sm:%s330]
  %vm332 = vcmask 1043458
  %v333 = vsel %vm332, %v331, %v328
  %s334 = scalar_lea.vmem %s0, 1
  %s335 = smov 48
  %v336 = vld [vmem:[%s334] ss:$16 sm:%s335]
  %vm337 = vcmask 1045508
  %v338 = vsel %vm337, %v336, %v333
  %s339 = scalar_lea.vmem %s0, 1
  %s340 = smov 192
  %v341 = vld [vmem:[%s339] ss:$16 sm:%s340]
  %vm342 = vcmask 1047558
  %v343 = vsel %vm342, %v341, %v338
  %344 = vrot.lane.b32.xlu0 %v343, 8
  %v345 = vpop.permute.xlu0 %344
  %vm346 = vcmask 130112
  %347 = vst.msk [vmem:[%s1] sm:$0xff] %vm346, %v345

// kernel: double_conv.1
$region0: #{double_conv.1}
  #allocation0 [shape = 'u32[]', space=smem, size = 0x4, offset = 0x4, fixed_abs, tag = 'smem constant byte address 0x4 - core index']
  #allocation1 [shape = 'u32[144,128]{1,0:T(1,128)}', space=vmem, size = 0x12000, scoped, tag = 'internal scratch']
  %s0 = inlined_call_operand.vmem [shape: f32[32,64], index: 0, kind: input, shape index: {}]
  %s1 = inlined_call_operand.vmem [shape: bf16[3,64,128], index: 1, kind: input, shape index: {}]
  %s2 = inlined_call_operand.vmem [shape: bf16[3,128,128], index: 2, kind: input, shape index: {}]
  %s3 = inlined_call_operand.vmem [shape: f32[4,128], index: 3, kind: input, shape index: {}]
  %s4 = inlined_call_operand.vmem [shape: f32[128,8], index: 4, kind: input, shape index: {}]
  %s5 = inlined_call_operand.vmem [shape: f32[8,128], index: 5, kind: input, shape index: {}]
  %s6 = inlined_call_operand.vmem [shape: f32[32,128], index: 6, kind: output, shape index: {}]
  %s7 = sld [smem:[#allocation0]]
  $region34: #{double_conv.1} parent=0
    _
  %s9 = ssub.s32 1, %s7
  %s10 = scalar_select 0, %s9, %s7
  // Predicated region
  $region2: #{double_conv.1} parent=0 // pred_check
    _
  $region3: #{double_conv.1} parent=0 // pred_check_branch
    %12 = sbr.rel (0) target = $region5
  $region4: #{double_conv.1} parent=0 // pred_region
    _
  $region5: #{double_conv.1} parent=0 // pred_fallthru
    _
  // Predicated region
  $region6: #{double_conv.1} parent=0 // pred_check
    _
  $region7: #{double_conv.1} parent=0 // pred_check_branch
    %14 = sbr.rel (0) target = $region9
  $region8: #{double_conv.1} parent=0 // pred_region
    _
  $region9: #{double_conv.1} parent=0 // pred_fallthru
    _
  // Predicated region
  $region10: #{double_conv.1} parent=0 // pred_check
    _
  $region11: #{double_conv.1} parent=0 // pred_check_branch
    %16 = sbr.rel (0) target = $region13
  $region12: #{double_conv.1} parent=0 // pred_region
    _
  $region13: #{double_conv.1} parent=0 // pred_fallthru
    _
  // Predicated region
  $region14: #{double_conv.1} parent=0 // pred_check
    _
  $region15: #{double_conv.1} parent=0 // pred_check_branch
    %18 = sbr.rel (0) target = $region17
  $region16: #{double_conv.1} parent=0 // pred_region
    _
  $region17: #{double_conv.1} parent=0 // pred_fallthru
    _
  // Predicated region
  $region18: #{double_conv.1} parent=0 // pred_check
    _
  $region19: #{double_conv.1} parent=0 // pred_check_branch
    %20 = sbr.rel (0) target = $region21
  $region20: #{double_conv.1} parent=0 // pred_region
    _
  $region21: #{double_conv.1} parent=0 // pred_fallthru
    _
  // Predicated region
  $region22: #{double_conv.1} parent=0 // pred_check
    _
  $region23: #{double_conv.1} parent=0 // pred_check_branch
    %22 = sbr.rel (0) target = $region25
  $region24: #{double_conv.1} parent=0 // pred_region
    _
  $region25: #{double_conv.1} parent=0 // pred_fallthru
    _
  %v24 = vld [vmem:[%s3] sm:$0xf]
  %v25 = vld [vmem:[%s0] sm:$0xff]
  %v26 = vld [vmem:[%s0 + $0x8] sm:$0xff]
  %v27 = vld [vmem:[%s0 + $0x10] sm:$0xff]
  %v28 = vld [vmem:[%s0 + $0x18] sm:$0xff]
  %v29 = vlaneseq
  %v30 = vshrl.u32 %v29, 7
  %v31 = vadd.s32 %v30, 8
  %v32 = vadd.s32 %v30, 16
  %v33 = vadd.s32 %v30, 24
  %vm34 = vcmp.lt.s32.totalorder %v30, 0
  %v35 = vsub.s32 0, %v30
  %v36 = vsel %vm34, %v35, %v30
  %v37 = vshrl.u32 %v36, 4
  %v38 = vand.u32 %v36, 15
  %v39 = vsub.s32 0, %v38
  %v40 = vsel %vm34, %v39, %v38
  %vm41 = vcmp.lt.s32.totalorder %v31, 0
  %v42 = vsub.s32 0, %v31
  %v43 = vsel %vm41, %v42, %v31
  %v44 = vshrl.u32 %v43, 4
  %v45 = vand.u32 %v43, 15
  %v46 = vsub.s32 0, %v45
  %v47 = vsel %vm41, %v46, %v45
  %vm48 = vcmp.lt.s32.totalorder %v32, 0
  %v49 = vsub.s32 0, %v32
  %v50 = vsel %vm48, %v49, %v32
  %v51 = vshrl.u32 %v50, 4
  %v52 = vand.u32 %v50, 15
  %v53 = vsub.s32 0, %v52
  %v54 = vsel %vm48, %v53, %v52
  %vm55 = vcmp.lt.s32.totalorder %v33, 0
  %v56 = vsub.s32 0, %v33
  %v57 = vsel %vm55, %v56, %v33
  %v58 = vshrl.u32 %v57, 4
  %v59 = vand.u32 %v57, 15
  %v60 = vsub.s32 0, %v59
  %v61 = vsel %vm55, %v60, %v59
  %vm62 = vcmp.ne.s32.totalorder %v40, 0
  %vm63 = vcmp.ne.s32.totalorder %v47, 0
  %vm64 = vcmp.ne.s32.totalorder %v54, 0
  %vm65 = vcmp.ne.s32.totalorder %v61, 0
  %vm66 = vcmp.lt.s32.totalorder %v40, 0
  %vm67 = vcmp.lt.s32.totalorder %v47, 0
  %vm68 = vcmp.lt.s32.totalorder %v54, 0
  %vm69 = vcmp.lt.s32.totalorder %v61, 0
  %vm70 = vmand %vm66, %vm62
  %vm71 = vmand %vm67, %vm63
  %vm72 = vmand %vm68, %vm64
  %vm73 = vmand %vm69, %vm65
  %v74 = vadd.s32 %v40, 16
  %v75 = vadd.s32 %v47, 16
  %v76 = vadd.s32 %v54, 16
  %v77 = vadd.s32 %v61, 16
  %v78 = vsel %vm70, %v74, %v40
  %v79 = vsel %vm71, %v75, %v47
  %v80 = vsel %vm72, %v76, %v54
  %v81 = vsel %vm73, %v77, %v61
  %vm82 = vcmp.ne.s32.totalorder %v78, 0
  %vm83 = vcmp.ne.s32.totalorder %v79, 0
  %vm84 = vcmp.ne.s32.totalorder %v80, 0
  %vm85 = vcmp.ne.s32.totalorder %v81, 0
  %v86 = vrot.slane %v25, 7
  %v87 = vrot.slane %v26, 7
  %v88 = vrot.slane %v27, 7
  %v89 = vrot.slane %v28, 7
  %vm90 = vcmp.lt.s32.totalorder %v30, 1
  %v91 = vsel %vm90, %v88, %v89
  %v92 = vsel %vm90, %v87, %v88
  %v93 = vsel %vm90, %v86, %v87
  %v94 = vsel %vm90, %v89, %v86
  %v95 = vsel %vm82, %v94, 0.0
  %v96 = vsel %vm83, %v93, 0.0
  %v97 = vsel %vm84, %v92, 0.0
  %v98 = vsel %vm85, %v91, 0.0
  %vm99 = vcmp.ne.s32.totalorder %v78, 15
  %vm100 = vcmp.ne.s32.totalorder %v79, 15
  %vm101 = vcmp.ne.s32.totalorder %v80, 15
  %vm102 = vcmp.ne.s32.totalorder %v81, 15
  %v103 = vrot.slane %v25, 1
  %v104 = vrot.slane %v26, 1
  %v105 = vrot.slane %v27, 1
  %v106 = vrot.slane %v28, 1
  %vm107 = vcmp.lt.s32.totalorder %v30, 7
  %v108 = vsel %vm107, %v105, %v106
  %v109 = vsel %vm107, %v104, %v105
  %v110 = vsel %vm107, %v103, %v104
  %v111 = vsel %vm107, %v106, %v103
  %v112 = vsel %vm99, %v110, 0.0
  %v113 = vsel %vm100, %v109, 0.0
  %v114 = vsel %vm101, %v108, 0.0
  %v115 = vsel %vm102, %v111, 0.0
  %v116 = vpack.c.bf16 %v96, %v95
  %v117 = vpack.c.bf16 %v98, %v97
  %v118 = vld [vmem:[%s1] sm:$0xf]
  %v119 = vld [vmem:[%s1 + $0x4] sm:$0xf]
  %v120 = vld [vmem:[%s1 + $0x8] sm:$0xf]
  %v121 = vld [vmem:[%s1 + $0xc] sm:$0xf]
  %v122 = vld [vmem:[%s1 + $0x10] sm:$0xf]
  %v123 = vld [vmem:[%s1 + $0x14] sm:$0xf]
  %v124 = vld [vmem:[%s1 + $0x18] sm:$0xf]
  %v125 = vld [vmem:[%s1 + $0x1c] sm:$0xf]
  %v126 = vpack.c.bf16 %v26, %v25
  %v127 = vpack.c.bf16 %v28, %v27
  %s128 = scalar_lea.vmem %s1, 32
  %v129 = vld [vmem:[%s128] sm:$0xf]
  %v130 = vld [vmem:[%s128 + $0x4] sm:$0xf]
  %v131 = vld [vmem:[%s128 + $0x8] sm:$0xf]
  %v132 = vld [vmem:[%s128 + $0xc] sm:$0xf]
  %v133 = vld [vmem:[%s128 + $0x10] sm:$0xf]
  %v134 = vld [vmem:[%s128 + $0x14] sm:$0xf]
  %v135 = vld [vmem:[%s128 + $0x18] sm:$0xf]
  %v136 = vld [vmem:[%s128 + $0x1c] sm:$0xf]
  %v145 = vunpack.c.l.b16 %v129
  %v146 = vunpack.c.l.b16 %v130
  %v147 = vunpack.c.l.b16 %v131
  %v148 = vunpack.c.l.b16 %v132
  %v149 = vunpack.c.l.b16 %v133
  %v150 = vunpack.c.l.b16 %v134
  %v151 = vunpack.c.l.b16 %v135
  %v152 = vunpack.c.l.b16 %v136
  %v153 = vpack.c.b16 %v146, %v145
  %v154 = vpack.c.b16 %v148, %v147
  %v155 = vpack.c.b16 %v150, %v149
  %v156 = vpack.c.b16 %v152, %v151
  %vm161 = vcmask 523264
  %v163 = vsel %vm161, %v126, 0
  %v166 = vsel %vm161, %v127, 0
  %168 = vmatprep.subr.bf16.mxu0 0
  %169 = vmatpush1.bf16.msra.mxu0 %v153
  %170 = vmatprep.subr.bf16.mxu0 0
  %171 = vmatpush1.bf16.msra.mxu0 %v154
  %172 = vmatprep.subr.bf16.mxu0 0
  %173 = vmatpush1.bf16.msra.mxu0 %v155
  %174 = vmatprep.subr.bf16.mxu0 0
  %175 = vmatpush1.bf16.msra.mxu0 %v156
  %176 = vmatprep.subr.bf16.mxu0 0
  %177 = vmatpush1.bf16.msra.mxu0 0
  %178 = vmatprep.subr.bf16.mxu0 0
  %179 = vmatpush1.bf16.msra.mxu0 0
  %180 = vmatprep.subr.bf16.mxu0 0
  %181 = vmatpush1.bf16.msra.mxu0 0
  %182 = vmatprep.subr.bf16.mxu0 0
  %183 = vmatpush1.bf16.msra.mxu0 0
  %184 = vmatprep.subr.bf16.mxu0 0
  %185 = vmatpush1.bf16.msra.mxu0 0
  %186 = vmatprep.subr.bf16.mxu0 0
  %187 = vmatpush1.bf16.msra.mxu0 0
  %188 = vmatprep.subr.bf16.mxu0 0
  %189 = vmatpush1.bf16.msra.mxu0 0
  %190 = vmatprep.subr.bf16.mxu0 0
  %191 = vmatpush1.bf16.msra.mxu0 0
  %192 = vmatprep.subr.bf16.mxu0 0
  %193 = vmatpush1.bf16.msra.mxu0 0
  %194 = vmatprep.subr.bf16.mxu0 0
  %195 = vmatpush1.bf16.msra.mxu0 0
  %196 = vmatprep.subr.bf16.mxu0 0
  %197 = vmatpush1.bf16.msra.mxu0 0
  %198 = vmatprep.subr.bf16.mxu0 0
  %199 = vmatpush1.bf16.msra.mxu0 0
  %200 = vmatprep.mubr.bf16.mxu0 0
  %201 = vmatmul.mubr.bf16.gmra.mrb[0].mxu0 %v163
  %v202 = vpop.f32.mrb[0].mxu0
  %v203 = vadd.f32 0.0, %v202
  %v204 = vpop.f32.mrb[0].mxu0
  %v205 = vpop.f32.mrb[0].mxu0
  %v206 = vadd.f32 0.0, %v205
  %v207 = vpop.f32.mrb[0].mxu0
  %208 = vmatprep.mubr.bf16.mxu0 0
  %209 = vmatmul.mubr.bf16.gmra.mrb[0].mxu0 %v166
  %v210 = vpop.f32.mrb[0].mxu0
  %v211 = vadd.f32 0.0, %v210
  %v212 = vpop.f32.mrb[0].mxu0
  %v213 = vpop.f32.mrb[0].mxu0
  %v214 = vadd.f32 0.0, %v213
  %v215 = vpop.f32.mrb[0].mxu0
  %216 = vdwg.mxu0
  %v225 = vunpack.c.l.b16 %v118
  %v226 = vunpack.c.l.b16 %v119
  %v227 = vunpack.c.l.b16 %v120
  %v228 = vunpack.c.l.b16 %v121
  %v229 = vunpack.c.l.b16 %v122
  %v230 = vunpack.c.l.b16 %v123
  %v231 = vunpack.c.l.b16 %v124
  %v232 = vunpack.c.l.b16 %v125
  %v233 = vpack.c.b16 %v226, %v225
  %v234 = vpack.c.b16 %v228, %v227
  %v235 = vpack.c.b16 %v230, %v229
  %v236 = vpack.c.b16 %v232, %v231
  %v242 = vsel %vm161, %v116, 0
  %v245 = vsel %vm161, %v117, 0
  %247 = vmatprep.subr.bf16.mxu0 0
  %248 = vmatpush1.bf16.msra.mxu0 %v233
  %249 = vmatprep.subr.bf16.mxu0 0
  %250 = vmatpush1.bf16.msra.mxu0 %v234
  %251 = vmatprep.subr.bf16.mxu0 0
  %252 = vmatpush1.bf16.msra.mxu0 %v235
  %253 = vmatprep.subr.bf16.mxu0 0
  %254 = vmatpush1.bf16.msra.mxu0 %v236
  %255 = vmatprep.subr.bf16.mxu0 0
  %256 = vmatpush1.bf16.msra.mxu0 0
  %257 = vmatprep.subr.bf16.mxu0 0
  %258 = vmatpush1.bf16.msra.mxu0 0
  %259 = vmatprep.subr.bf16.mxu0 0
  %260 = vmatpush1.bf16.msra.mxu0 0
  %261 = vmatprep.subr.bf16.mxu0 0
  %262 = vmatpush1.bf16.msra.mxu0 0
  %263 = vmatprep.subr.bf16.mxu0 0
  %264 = vmatpush1.bf16.msra.mxu0 0
  %265 = vmatprep.subr.bf16.mxu0 0
  %266 = vmatpush1.bf16.msra.mxu0 0
  %267 = vmatprep.subr.bf16.mxu0 0
  %268 = vmatpush1.bf16.msra.mxu0 0
  %269 = vmatprep.subr.bf16.mxu0 0
  %270 = vmatpush1.bf16.msra.mxu0 0
  %271 = vmatprep.subr.bf16.mxu0 0
  %272 = vmatpush1.bf16.msra.mxu0 0
  %273 = vmatprep.subr.bf16.mxu0 0
  %274 = vmatpush1.bf16.msra.mxu0 0
  %275 = vmatprep.subr.bf16.mxu0 0
  %276 = vmatpush1.bf16.msra.mxu0 0
  %277 = vmatprep.subr.bf16.mxu0 0
  %278 = vmatpush1.bf16.msra.mxu0 0
  %279 = vmatprep.mubr.bf16.mxu0 0
  %280 = vmatmul.mubr.bf16.gmra.mrb[0].mxu0 %v242
  %v281 = vpop.f32.mrb[0].mxu0
  %v282 = vadd.f32 %v203, %v281
  %v283 = vpop.f32.mrb[0].mxu0
  %v284 = vpop.f32.mrb[0].mxu0
  %v285 = vadd.f32 %v206, %v284
  %v286 = vpop.f32.mrb[0].mxu0
  %287 = vmatprep.mubr.bf16.mxu0 0
  %288 = vmatmul.mubr.bf16.gmra.mrb[0].mxu0 %v245
  %v289 = vpop.f32.mrb[0].mxu0
  %v290 = vadd.f32 %v211, %v289
  %v291 = vpop.f32.mrb[0].mxu0
  %v292 = vpop.f32.mrb[0].mxu0
  %v293 = vadd.f32 %v214, %v292
  %v294 = vpop.f32.mrb[0].mxu0
  %295 = vdwg.mxu0
  %v296 = vpack.c.bf16 %v113, %v112
  %v297 = vpack.c.bf16 %v115, %v114
  %s298 = scalar_lea.vmem %s1, 64
  %v299 = vld [vmem:[%s298] sm:$0xf]
  %v300 = vld [vmem:[%s298 + $0x4] sm:$0xf]
  %v301 = vld [vmem:[%s298 + $0x8] sm:$0xf]
  %v302 = vld [vmem:[%s298 + $0xc] sm:$0xf]
  %v303 = vld [vmem:[%s298 + $0x10] sm:$0xf]
  %v304 = vld [vmem:[%s298 + $0x14] sm:$0xf]
  %v305 = vld [vmem:[%s298 + $0x18] sm:$0xf]
  %v306 = vld [vmem:[%s298 + $0x1c] sm:$0xf]
  %v315 = vunpack.c.l.b16 %v299
  %v316 = vunpack.c.l.b16 %v300
  %v317 = vunpack.c.l.b16 %v301
  %v318 = vunpack.c.l.b16 %v302
  %v319 = vunpack.c.l.b16 %v303
  %v320 = vunpack.c.l.b16 %v304
  %v321 = vunpack.c.l.b16 %v305
  %v322 = vunpack.c.l.b16 %v306
  %v323 = vpack.c.b16 %v316, %v315
  %v324 = vpack.c.b16 %v318, %v317
  %v325 = vpack.c.b16 %v320, %v319
  %v326 = vpack.c.b16 %v322, %v321
  %v332 = vsel %vm161, %v296, 0
  %v335 = vsel %vm161, %v297, 0
  %337 = vmatprep.subr.bf16.mxu0 0
  %338 = vmatpush1.bf16.msra.mxu0 %v323
  %339 = vmatprep.subr.bf16.mxu0 0
  %340 = vmatpush1.bf16.msra.mxu0 %v324
  %341 = vmatprep.subr.bf16.mxu0 0
  %342 = vmatpush1.bf16.msra.mxu0 %v325
  %343 = vmatprep.subr.bf16.mxu0 0
  %344 = vmatpush1.bf16.msra.mxu0 %v326
  %345 = vmatprep.subr.bf16.mxu0 0
  %346 = vmatpush1.bf16.msra.mxu0 0
  %347 = vmatprep.subr.bf16.mxu0 0
  %348 = vmatpush1.bf16.msra.mxu0 0
  %349 = vmatprep.subr.bf16.mxu0 0
  %350 = vmatpush1.bf16.msra.mxu0 0
  %351 = vmatprep.subr.bf16.mxu0 0
  %352 = vmatpush1.bf16.msra.mxu0 0
  %353 = vmatprep.subr.bf16.mxu0 0
  %354 = vmatpush1.bf16.msra.mxu0 0
  %355 = vmatprep.subr.bf16.mxu0 0
  %356 = vmatpush1.bf16.msra.mxu0 0
  %357 = vmatprep.subr.bf16.mxu0 0
  %358 = vmatpush1.bf16.msra.mxu0 0
  %359 = vmatprep.subr.bf16.mxu0 0
  %360 = vmatpush1.bf16.msra.mxu0 0
  %361 = vmatprep.subr.bf16.mxu0 0
  %362 = vmatpush1.bf16.msra.mxu0 0
  %363 = vmatprep.subr.bf16.mxu0 0
  %364 = vmatpush1.bf16.msra.mxu0 0
  %365 = vmatprep.subr.bf16.mxu0 0
  %366 = vmatpush1.bf16.msra.mxu0 0
  %367 = vmatprep.subr.bf16.mxu0 0
  %368 = vmatpush1.bf16.msra.mxu0 0
  %369 = vmatprep.mubr.bf16.mxu0 0
  %370 = vmatmul.mubr.bf16.gmra.mrb[0].mxu0 %v332
  %v371 = vpop.f32.mrb[0].mxu0
  %v372 = vadd.f32 0.0, %v371
  %v373 = vpop.f32.mrb[0].mxu0
  %v374 = vpop.f32.mrb[0].mxu0
  %v375 = vadd.f32 0.0, %v374
  %v376 = vpop.f32.mrb[0].mxu0
  %377 = vmatprep.mubr.bf16.mxu0 0
  %378 = vmatmul.mubr.bf16.gmra.mrb[0].mxu0 %v335
  %v379 = vpop.f32.mrb[0].mxu0
  %v380 = vadd.f32 0.0, %v379
  %v381 = vpop.f32.mrb[0].mxu0
  %v382 = vpop.f32.mrb[0].mxu0
  %v383 = vadd.f32 0.0, %v382
  %v384 = vpop.f32.mrb[0].mxu0
  %385 = vdwg.mxu0
  %v386 = vadd.f32 %v282, %v372
  %v387 = vadd.f32 %v285, %v375
  %v388 = vadd.f32 %v290, %v380
  %v389 = vadd.f32 %v293, %v383
  %v390 = vmul.f32 %v386, %v386
  %v391 = vmul.f32 %v387, %v387
  %v392 = vmul.f32 %v388, %v388
  %v393 = vmul.f32 %v389, %v389
  %v394 = vld [vmem:[%s4] sm:$0xff]
  %v395 = vld [vmem:[%s4 + $0x8] sm:$0xff]
  %v396 = vld [vmem:[%s4 + $0x10] sm:$0xff]
  %v397 = vld [vmem:[%s4 + $0x18] sm:$0xff]
  %v398 = vld [vmem:[%s4 + $0x20] sm:$0xff]
  %v399 = vld [vmem:[%s4 + $0x28] sm:$0xff]
  %v400 = vld [vmem:[%s4 + $0x30] sm:$0xff]
  %v401 = vld [vmem:[%s4 + $0x38] sm:$0xff]
  %v402 = vld [vmem:[%s4 + $0x40] sm:$0xff]
  %v403 = vld [vmem:[%s4 + $0x48] sm:$0xff]
  %v404 = vld [vmem:[%s4 + $0x50] sm:$0xff]
  %v405 = vld [vmem:[%s4 + $0x58] sm:$0xff]
  %v406 = vld [vmem:[%s4 + $0x60] sm:$0xff]
  %v407 = vld [vmem:[%s4 + $0x68] sm:$0xff]
  %v408 = vld [vmem:[%s4 + $0x70] sm:$0xff]
  %v409 = vld [vmem:[%s4 + $0x78] sm:$0xff]
  %410 = vmatprep.subr.mxu0 0.0
  %411 = vmatpush1.msra.mxu0 %v394
  %412 = vmatprep.subr.mxu0 0.0
  %413 = vmatpush1.msra.mxu0 %v395
  %414 = vmatprep.subr.mxu0 0.0
  %415 = vmatpush1.msra.mxu0 %v396
  %416 = vmatprep.subr.mxu0 0.0
  %417 = vmatpush1.msra.mxu0 %v397
  %418 = vmatprep.subr.mxu0 0.0
  %419 = vmatpush1.msra.mxu0 %v398
  %420 = vmatprep.subr.mxu0 0.0
  %421 = vmatpush1.msra.mxu0 %v399
  %422 = vmatprep.subr.mxu0 0.0
  %423 = vmatpush1.msra.mxu0 %v400
  %424 = vmatprep.subr.mxu0 0.0
  %425 = vmatpush1.msra.mxu0 %v401
  %426 = vmatprep.subr.mxu0 0.0
  %427 = vmatpush1.msra.mxu0 %v402
  %428 = vmatprep.subr.mxu0 0.0
  %429 = vmatpush1.msra.mxu0 %v403
  %430 = vmatprep.subr.mxu0 0.0
  %431 = vmatpush1.msra.mxu0 %v404
  %432 = vmatprep.subr.mxu0 0.0
  %433 = vmatpush1.msra.mxu0 %v405
  %434 = vmatprep.subr.mxu0 0.0
  %435 = vmatpush1.msra.mxu0 %v406
  %436 = vmatprep.subr.mxu0 0.0
  %437 = vmatpush1.msra.mxu0 %v407
  %438 = vmatprep.subr.mxu0 0.0
  %439 = vmatpush1.msra.mxu0 %v408
  %440 = vmatprep.subr.mxu0 0.0
  %441 = vmatpush1.msra.mxu0 %v409
  %442 = vmatprep.subr.mxu0 0.0
  %443 = vmatpush1.msra.mxu0 0.0
  %444 = vmatprep.subr.mxu0 0.0
  %445 = vmatpush1.msra.mxu0 0.0
  %446 = vmatprep.subr.mxu0 0.0
  %447 = vmatpush1.msra.mxu0 0.0
  %448 = vmatprep.subr.mxu0 0.0
  %449 = vmatpush1.msra.mxu0 0.0
  %450 = vmatprep.subr.mxu0 0.0
  %451 = vmatpush1.msra.mxu0 0.0
  %452 = vmatprep.subr.mxu0 0.0
  %453 = vmatpush1.msra.mxu0 0.0
  %454 = vmatprep.subr.mxu0 0.0
  %455 = vmatpush1.msra.mxu0 0.0
  %456 = vmatprep.subr.mxu0 0.0
  %457 = vmatpush1.msra.mxu0 0.0
  %458 = vmatprep.subr.mxu0 0.0
  %459 = vmatpush1.msra.mxu0 0.0
  %460 = vmatprep.subr.mxu0 0.0
  %461 = vmatpush1.msra.mxu0 0.0
  %462 = vmatprep.subr.mxu0 0.0
  %463 = vmatpush1.msra.mxu0 0.0
  %464 = vmatprep.subr.mxu0 0.0
  %465 = vmatpush1.msra.mxu0 0.0
  %466 = vmatprep.subr.mxu0 0.0
  %467 = vmatpush1.msra.mxu0 0.0
  %468 = vmatprep.subr.mxu0 0.0
  %469 = vmatpush1.msra.mxu0 0.0
  %470 = vmatprep.subr.mxu0 0.0
  %471 = vmatpush1.msra.mxu0 0.0
  %472 = vmatprep.subr.mxu0 0.0
  %473 = vmatpush1.msra.mxu0 0.0
  %474 = vmatprep.mubr.f32.mxu0 0.0
  %475 = vmatmul.mubr.f32.gmra.mrb[0].mxu0 %v386
  %v476 = vpop.f32.mrb[0].mxu0
  %v477 = vadd.f32 0.0, %v476
  %v478 = vpop.f32.mrb[0].mxu0
  %479 = vmatprep.mubr.f32.mxu0 0.0
  %480 = vmatmul.mubr.f32.gmra.mrb[0].mxu0 %v387
  %v481 = vpop.f32.mrb[0].mxu0
  %v482 = vadd.f32 0.0, %v481
  %v483 = vpop.f32.mrb[0].mxu0
  %484 = vmatprep.mubr.f32.mxu0 0.0
  %485 = vmatmul.mubr.f32.gmra.mrb[0].mxu0 %v388
  %v486 = vpop.f32.mrb[0].mxu0
  %v487 = vadd.f32 0.0, %v486
  %v488 = vpop.f32.mrb[0].mxu0
  %489 = vmatprep.mubr.f32.mxu0 0.0
  %490 = vmatmul.mubr.f32.gmra.mrb[0].mxu0 %v389
  %v491 = vpop.f32.mrb[0].mxu0
  %v492 = vadd.f32 0.0, %v491
  %v493 = vpop.f32.mrb[0].mxu0
  %494 = vmatprep.mubr.f32.mxu0 0.0
  %495 = vmatmul.mubr.f32.gmra.mrb[0].mxu0 %v390
  %v496 = vpop.f32.mrb[0].mxu0
  %v497 = vadd.f32 0.0, %v496
  %v498 = vpop.f32.mrb[0].mxu0
  %499 = vmatprep.mubr.f32.mxu0 0.0
  %500 = vmatmul.mubr.f32.gmra.mrb[0].mxu0 %v391
  %v501 = vpop.f32.mrb[0].mxu0
  %v502 = vadd.f32 0.0, %v501
  %v503 = vpop.f32.mrb[0].mxu0
  %504 = vmatprep.mubr.f32.mxu0 0.0
  %505 = vmatmul.mubr.f32.gmra.mrb[0].mxu0 %v392
  %v506 = vpop.f32.mrb[0].mxu0
  %v507 = vadd.f32 0.0, %v506
  %v508 = vpop.f32.mrb[0].mxu0
  %509 = vmatprep.mubr.f32.mxu0 0.0
  %510 = vmatmul.mubr.f32.gmra.mrb[0].mxu0 %v393
  %v511 = vpop.f32.mrb[0].mxu0
  %v512 = vadd.f32 0.0, %v511
  %v513 = vpop.f32.mrb[0].mxu0
  %514 = vdwg.mxu0
  %vm515 = vcmask 64512
  %v516 = vsel %vm515, %v477, 0.0
  %v517 = vsel %vm515, %v482, 0.0
  %v518 = vadd.f32 %v516, %v517
  %v519 = vsel %vm515, %v487, 0.0
  %v520 = vadd.f32 %v518, %v519
  %v521 = vsel %vm515, %v492, 0.0
  %v522 = vadd.f32 %v520, %v521
  %v523 = vrot.slane %v522, 4
  %v524 = vadd.f32 %v522, %v523
  %v525 = vrot.slane %v524, 2
  %v526 = vadd.f32 %v524, %v525
  %v527 = vrot.slane %v526, 1
  %v528 = vadd.f32 %v526, %v527
  %v529 = vmul.f32 %v528, 0.001953125
  %v530 = vsel %vm515, %v497, 0.0
  %v531 = vsel %vm515, %v502, 0.0
  %v532 = vadd.f32 %v530, %v531
  %v533 = vsel %vm515, %v507, 0.0
  %v534 = vadd.f32 %v532, %v533
  %v535 = vsel %vm515, %v512, 0.0
  %v536 = vadd.f32 %v534, %v535
  %v537 = vrot.slane %v536, 4
  %v538 = vadd.f32 %v536, %v537
  %v539 = vrot.slane %v538, 2
  %v540 = vadd.f32 %v538, %v539
  %v541 = vrot.slane %v540, 1
  %v542 = vadd.f32 %v540, %v541
  %v543 = vmul.f32 %v542, 0.001953125
  %vm544 = vcmask 1040384
  %v545 = vsel %vm544, %v529, %v543
  %v546 = vld [vmem:[%s5] sm:$0xff]
  %v548 = vsel %vm515, %v545, 0
  %550 = vmatprep.subr.mxu0 0.0
  %551 = vmatpush1.msra.mxu0 %v546
  %552 = vmatprep.subr.mxu0 0.0
  %553 = vmatpush1.msra.mxu0 0.0
  %554 = vmatprep.subr.mxu0 0.0
  %555 = vmatpush1.msra.mxu0 0.0
  %556 = vmatprep.subr.mxu0 0.0
  %557 = vmatpush1.msra.mxu0 0.0
  %558 = vmatprep.subr.mxu0 0.0
  %559 = vmatpush1.msra.mxu0 0.0
  %560 = vmatprep.subr.mxu0 0.0
  %561 = vmatpush1.msra.mxu0 0.0
  %562 = vmatprep.subr.mxu0 0.0
  %563 = vmatpush1.msra.mxu0 0.0
  %564 = vmatprep.subr.mxu0 0.0
  %565 = vmatpush1.msra.mxu0 0.0
  %566 = vmatprep.subr.mxu0 0.0
  %567 = vmatpush1.msra.mxu0 0.0
  %568 = vmatprep.subr.mxu0 0.0
  %569 = vmatpush1.msra.mxu0 0.0
  %570 = vmatprep.subr.mxu0 0.0
  %571 = vmatpush1.msra.mxu0 0.0
  %572 = vmatprep.subr.mxu0 0.0
  %573 = vmatpush1.msra.mxu0 0.0
  %574 = vmatprep.subr.mxu0 0.0
  %575 = vmatpush1.msra.mxu0 0.0
  %576 = vmatprep.subr.mxu0 0.0
  %577 = vmatpush1.msra.mxu0 0.0
  %578 = vmatprep.subr.mxu0 0.0
  %579 = vmatpush1.msra.mxu0 0.0
  %580 = vmatprep.subr.mxu0 0.0
  %581 = vmatpush1.msra.mxu0 0.0
  %582 = vmatprep.subr.mxu0 0.0
  %583 = vmatpush1.msra.mxu0 0.0
  %584 = vmatprep.subr.mxu0 0.0
  %585 = vmatpush1.msra.mxu0 0.0
  %586 = vmatprep.subr.mxu0 0.0
  %587 = vmatpush1.msra.mxu0 0.0
  %588 = vmatprep.subr.mxu0 0.0
  %589 = vmatpush1.msra.mxu0 0.0
  %590 = vmatprep.subr.mxu0 0.0
  %591 = vmatpush1.msra.mxu0 0.0
  %592 = vmatprep.subr.mxu0 0.0
  %593 = vmatpush1.msra.mxu0 0.0
  %594 = vmatprep.subr.mxu0 0.0
  %595 = vmatpush1.msra.mxu0 0.0
  %596 = vmatprep.subr.mxu0 0.0
  %597 = vmatpush1.msra.mxu0 0.0
  %598 = vmatprep.subr.mxu0 0.0
  %599 = vmatpush1.msra.mxu0 0.0
  %600 = vmatprep.subr.mxu0 0.0
  %601 = vmatpush1.msra.mxu0 0.0
  %602 = vmatprep.subr.mxu0 0.0
  %603 = vmatpush1.msra.mxu0 0.0
  %604 = vmatprep.subr.mxu0 0.0
  %605 = vmatpush1.msra.mxu0 0.0
  %606 = vmatprep.subr.mxu0 0.0
  %607 = vmatpush1.msra.mxu0 0.0
  %608 = vmatprep.subr.mxu0 0.0
  %609 = vmatpush1.msra.mxu0 0.0
  %610 = vmatprep.subr.mxu0 0.0
  %611 = vmatpush1.msra.mxu0 0.0
  %612 = vmatprep.subr.mxu0 0.0
  %613 = vmatpush1.msra.mxu0 0.0
  %614 = vmatprep.mubr.f32.mxu0 0.0
  %615 = vmatmul.mubr.f32.gmra.mrb[0].mxu0 %v548
  %v616 = vpop.f32.mrb[0].mxu0
  %v617 = vadd.f32 0.0, %v616
  %v618 = vpop.f32.mrb[0].mxu0
  %619 = vdwg.mxu0
  %v620 = vmul.f32 %v617, %v617
  %v622 = vrot.slane %v620, 7
  %v624 = vsub.f32 %v617, %v622
  %v625 = vadd.f32 %v624, 1e-05
  %v626 = vrsqrt.pop %v625
  %v628 = vrot.slane %v626, 1
  %v630 = vmul.f32 %v24, %v628
  %v631 = vmul.f32 %v617, %v630
  %v633 = vrot.slane %v631, 7
  %v635 = vsub.f32 %v24, %v633
  %v636 = vlaneseq
  %v637 = vshrl.u32 %v636, 7
  %v638 = vsub.s32 0, %v637
  %v639 = vrot.slane %v630, %v638
  %v640 = vmul.f32 %v386, %v639
  %v641 = vmul.f32 %v387, %v639
  %v642 = vmul.f32 %v388, %v639
  %v643 = vmul.f32 %v389, %v639
  %v644 = vlaneseq
  %v645 = vshrl.u32 %v644, 7
  %v646 = vsub.s32 1, %v645
  %v647 = vrot.slane %v635, %v646
  %v648 = vadd.f32 %v640, %v647
  %v649 = vadd.f32 %v641, %v647
  %v650 = vadd.f32 %v642, %v647
  %v651 = vadd.f32 %v643, %v647
  %v652 = vmax.f32 %v648, 0.0
  %v653 = vmax.f32 %v649, 0.0
  %v654 = vmax.f32 %v650, 0.0
  %v655 = vmax.f32 %v651, 0.0
  %v656 = vrot.slane %v652, 7
  %v657 = vrot.slane %v653, 7
  %v658 = vrot.slane %v654, 7
  %v659 = vrot.slane %v655, 7
  %v660 = vsel %vm90, %v658, %v659
  %v661 = vsel %vm90, %v657, %v658
  %v662 = vsel %vm90, %v656, %v657
  %v663 = vsel %vm90, %v659, %v656
  %v664 = vsel %vm82, %v663, 0.0
  %v665 = vsel %vm83, %v662, 0.0
  %v666 = vsel %vm84, %v661, 0.0
  %v667 = vsel %vm85, %v660, 0.0
  %v668 = vrot.slane %v652, 1
  %v669 = vrot.slane %v653, 1
  %v670 = vrot.slane %v654, 1
  %v671 = vrot.slane %v655, 1
  %v672 = vsel %vm107, %v670, %v671
  %v673 = vsel %vm107, %v669, %v670
  %v674 = vsel %vm107, %v668, %v669
  %v675 = vsel %vm107, %v671, %v668
  %v676 = vsel %vm99, %v674, 0.0
  %v677 = vsel %vm100, %v673, 0.0
  %v678 = vsel %vm101, %v672, 0.0
  %v679 = vsel %vm102, %v675, 0.0
  %v680 = vpack.c.bf16 %v665, %v664
  %v681 = vpack.c.bf16 %v667, %v666
  %v682 = vld [vmem:[%s2] sm:$0xf]
  %v683 = vld [vmem:[%s2 + $0x4] sm:$0xf]
  %v684 = vld [vmem:[%s2 + $0x8] sm:$0xf]
  %v685 = vld [vmem:[%s2 + $0xc] sm:$0xf]
  %v686 = vld [vmem:[%s2 + $0x10] sm:$0xf]
  %v687 = vld [vmem:[%s2 + $0x14] sm:$0xf]
  %v688 = vld [vmem:[%s2 + $0x18] sm:$0xf]
  %v689 = vld [vmem:[%s2 + $0x1c] sm:$0xf]
  %v690 = vld [vmem:[%s2 + $0x20] sm:$0xf]
  %v691 = vld [vmem:[%s2 + $0x24] sm:$0xf]
  %v692 = vld [vmem:[%s2 + $0x28] sm:$0xf]
  %v693 = vld [vmem:[%s2 + $0x2c] sm:$0xf]
  %v694 = vld [vmem:[%s2 + $0x30] sm:$0xf]
  %v695 = vld [vmem:[%s2 + $0x34] sm:$0xf]
  %v696 = vld [vmem:[%s2 + $0x38] sm:$0xf]
  %v697 = vld [vmem:[%s2 + $0x3c] sm:$0xf]
  %v698 = vpack.c.bf16 %v653, %v652
  %v699 = vpack.c.bf16 %v655, %v654
  %s700 = scalar_lea.vmem %s2, 64
  %v701 = vld [vmem:[%s700] sm:$0xf]
  %v702 = vld [vmem:[%s700 + $0x4] sm:$0xf]
  %v703 = vld [vmem:[%s700 + $0x8] sm:$0xf]
  %v704 = vld [vmem:[%s700 + $0xc] sm:$0xf]
  %v705 = vld [vmem:[%s700 + $0x10] sm:$0xf]
  %v706 = vld [vmem:[%s700 + $0x14] sm:$0xf]
  %v707 = vld [vmem:[%s700 + $0x18] sm:$0xf]
  %v708 = vld [vmem:[%s700 + $0x1c] sm:$0xf]
  %v709 = vld [vmem:[%s700 + $0x20] sm:$0xf]
  %v710 = vld [vmem:[%s700 + $0x24] sm:$0xf]
  %v711 = vld [vmem:[%s700 + $0x28] sm:$0xf]
  %v712 = vld [vmem:[%s700 + $0x2c] sm:$0xf]
  %v713 = vld [vmem:[%s700 + $0x30] sm:$0xf]
  %v714 = vld [vmem:[%s700 + $0x34] sm:$0xf]
  %v715 = vld [vmem:[%s700 + $0x38] sm:$0xf]
  %v716 = vld [vmem:[%s700 + $0x3c] sm:$0xf]
  %v733 = vunpack.c.l.b16 %v701
  %v734 = vunpack.c.l.b16 %v702
  %v735 = vunpack.c.l.b16 %v703
  %v736 = vunpack.c.l.b16 %v704
  %v737 = vunpack.c.l.b16 %v705
  %v738 = vunpack.c.l.b16 %v706
  %v739 = vunpack.c.l.b16 %v707
  %v740 = vunpack.c.l.b16 %v708
  %v741 = vunpack.c.l.b16 %v709
  %v742 = vunpack.c.l.b16 %v710
  %v743 = vunpack.c.l.b16 %v711
  %v744 = vunpack.c.l.b16 %v712
  %v745 = vunpack.c.l.b16 %v713
  %v746 = vunpack.c.l.b16 %v714
  %v747 = vunpack.c.l.b16 %v715
  %v748 = vunpack.c.l.b16 %v716
  %v749 = vpack.c.b16 %v734, %v733
  %v750 = vpack.c.b16 %v736, %v735
  %v751 = vpack.c.b16 %v738, %v737
  %v752 = vpack.c.b16 %v740, %v739
  %v753 = vpack.c.b16 %v742, %v741
  %v754 = vpack.c.b16 %v744, %v743
  %v755 = vpack.c.b16 %v746, %v745
  %v756 = vpack.c.b16 %v748, %v747
  %765 = vmatprep.subr.bf16.mxu0 0
  %766 = vmatpush1.bf16.msra.mxu0 %v749
  %767 = vmatprep.subr.bf16.mxu0 0
  %768 = vmatpush1.bf16.msra.mxu0 %v750
  %769 = vmatprep.subr.bf16.mxu0 0
  %770 = vmatpush1.bf16.msra.mxu0 %v751
  %771 = vmatprep.subr.bf16.mxu0 0
  %772 = vmatpush1.bf16.msra.mxu0 %v752
  %773 = vmatprep.subr.bf16.mxu0 0
  %774 = vmatpush1.bf16.msra.mxu0 %v753
  %775 = vmatprep.subr.bf16.mxu0 0
  %776 = vmatpush1.bf16.msra.mxu0 %v754
  %777 = vmatprep.subr.bf16.mxu0 0
  %778 = vmatpush1.bf16.msra.mxu0 %v755
  %779 = vmatprep.subr.bf16.mxu0 0
  %780 = vmatpush1.bf16.msra.mxu0 %v756
  %781 = vmatprep.subr.bf16.mxu0 0
  %782 = vmatpush1.bf16.msra.mxu0 0
  %783 = vmatprep.subr.bf16.mxu0 0
  %784 = vmatpush1.bf16.msra.mxu0 0
  %785 = vmatprep.subr.bf16.mxu0 0
  %786 = vmatpush1.bf16.msra.mxu0 0
  %787 = vmatprep.subr.bf16.mxu0 0
  %788 = vmatpush1.bf16.msra.mxu0 0
  %789 = vmatprep.subr.bf16.mxu0 0
  %790 = vmatpush1.bf16.msra.mxu0 0
  %791 = vmatprep.subr.bf16.mxu0 0
  %792 = vmatpush1.bf16.msra.mxu0 0
  %793 = vmatprep.subr.bf16.mxu0 0
  %794 = vmatpush1.bf16.msra.mxu0 0
  %795 = vmatprep.subr.bf16.mxu0 0
  %796 = vmatpush1.bf16.msra.mxu0 0
  %797 = vmatprep.mubr.bf16.mxu0 0
  %798 = vmatmul.mubr.bf16.gmra.mrb[0].mxu0 %v698
  %v799 = vpop.f32.mrb[0].mxu0
  %v800 = vadd.f32 0.0, %v799
  %v801 = vpop.f32.mrb[0].mxu0
  %v802 = vpop.f32.mrb[0].mxu0
  %v803 = vadd.f32 0.0, %v802
  %v804 = vpop.f32.mrb[0].mxu0
  %805 = vmatprep.mubr.bf16.mxu0 0
  %806 = vmatmul.mubr.bf16.gmra.mrb[0].mxu0 %v699
  %v807 = vpop.f32.mrb[0].mxu0
  %v808 = vadd.f32 0.0, %v807
  %v809 = vpop.f32.mrb[0].mxu0
  %v810 = vpop.f32.mrb[0].mxu0
  %v811 = vadd.f32 0.0, %v810
  %v812 = vpop.f32.mrb[0].mxu0
  %813 = vdwg.mxu0
  %v830 = vunpack.c.l.b16 %v682
  %v831 = vunpack.c.l.b16 %v683
  %v832 = vunpack.c.l.b16 %v684
  %v833 = vunpack.c.l.b16 %v685
  %v834 = vunpack.c.l.b16 %v686
  %v835 = vunpack.c.l.b16 %v687
  %v836 = vunpack.c.l.b16 %v688
  %v837 = vunpack.c.l.b16 %v689
  %v838 = vunpack.c.l.b16 %v690
  %v839 = vunpack.c.l.b16 %v691
  %v840 = vunpack.c.l.b16 %v692
  %v841 = vunpack.c.l.b16 %v693
  %v842 = vunpack.c.l.b16 %v694
  %v843 = vunpack.c.l.b16 %v695
  %v844 = vunpack.c.l.b16 %v696
  %v845 = vunpack.c.l.b16 %v697
  %v846 = vpack.c.b16 %v831, %v830
  %v847 = vpack.c.b16 %v833, %v832
  %v848 = vpack.c.b16 %v835, %v834
  %v849 = vpack.c.b16 %v837, %v836
  %v850 = vpack.c.b16 %v839, %v838
  %v851 = vpack.c.b16 %v841, %v840
  %v852 = vpack.c.b16 %v843, %v842
  %v853 = vpack.c.b16 %v845, %v844
  %862 = vmatprep.subr.bf16.mxu0 0
  %863 = vmatpush1.bf16.msra.mxu0 %v846
  %864 = vmatprep.subr.bf16.mxu0 0
  %865 = vmatpush1.bf16.msra.mxu0 %v847
  %866 = vmatprep.subr.bf16.mxu0 0
  %867 = vmatpush1.bf16.msra.mxu0 %v848
  %868 = vmatprep.subr.bf16.mxu0 0
  %869 = vmatpush1.bf16.msra.mxu0 %v849
  %870 = vmatprep.subr.bf16.mxu0 0
  %871 = vmatpush1.bf16.msra.mxu0 %v850
  %872 = vmatprep.subr.bf16.mxu0 0
  %873 = vmatpush1.bf16.msra.mxu0 %v851
  %874 = vmatprep.subr.bf16.mxu0 0
  %875 = vmatpush1.bf16.msra.mxu0 %v852
  %876 = vmatprep.subr.bf16.mxu0 0
  %877 = vmatpush1.bf16.msra.mxu0 %v853
  %878 = vmatprep.subr.bf16.mxu0 0
  %879 = vmatpush1.bf16.msra.mxu0 0
  %880 = vmatprep.subr.bf16.mxu0 0
  %881 = vmatpush1.bf16.msra.mxu0 0
  %882 = vmatprep.subr.bf16.mxu0 0
  %883 = vmatpush1.bf16.msra.mxu0 0
  %884 = vmatprep.subr.bf16.mxu0 0
  %885 = vmatpush1.bf16.msra.mxu0 0
  %886 = vmatprep.subr.bf16.mxu0 0
  %887 = vmatpush1.bf16.msra.mxu0 0
  %888 = vmatprep.subr.bf16.mxu0 0
  %889 = vmatpush1.bf16.msra.mxu0 0
  %890 = vmatprep.subr.bf16.mxu0 0
  %891 = vmatpush1.bf16.msra.mxu0 0
  %892 = vmatprep.subr.bf16.mxu0 0
  %893 = vmatpush1.bf16.msra.mxu0 0
  %894 = vmatprep.mubr.bf16.mxu0 0
  %895 = vmatmul.mubr.bf16.gmra.mrb[0].mxu0 %v680
  %v896 = vpop.f32.mrb[0].mxu0
  %v897 = vadd.f32 %v800, %v896
  %v898 = vpop.f32.mrb[0].mxu0
  %v899 = vpop.f32.mrb[0].mxu0
  %v900 = vadd.f32 %v803, %v899
  %v901 = vpop.f32.mrb[0].mxu0
  %902 = vmatprep.mubr.bf16.mxu0 0
  %903 = vmatmul.mubr.bf16.gmra.mrb[0].mxu0 %v681
  %v904 = vpop.f32.mrb[0].mxu0
  %v905 = vadd.f32 %v808, %v904
  %v906 = vpop.f32.mrb[0].mxu0
  %v907 = vpop.f32.mrb[0].mxu0
  %v908 = vadd.f32 %v811, %v907
  %v909 = vpop.f32.mrb[0].mxu0
  %910 = vdwg.mxu0
  %v911 = vpack.c.bf16 %v677, %v676
  %v912 = vpack.c.bf16 %v679, %v678
  %s913 = scalar_lea.vmem %s2, 128
  %v914 = vld [vmem:[%s913] sm:$0xf]
  %v915 = vld [vmem:[%s913 + $0x4] sm:$0xf]
  %v916 = vld [vmem:[%s913 + $0x8] sm:$0xf]
  %v917 = vld [vmem:[%s913 + $0xc] sm:$0xf]
  %v918 = vld [vmem:[%s913 + $0x10] sm:$0xf]
  %v919 = vld [vmem:[%s913 + $0x14] sm:$0xf]
  %v920 = vld [vmem:[%s913 + $0x18] sm:$0xf]
  %v921 = vld [vmem:[%s913 + $0x1c] sm:$0xf]
  %v922 = vld [vmem:[%s913 + $0x20] sm:$0xf]
  %v923 = vld [vmem:[%s913 + $0x24] sm:$0xf]
  %v924 = vld [vmem:[%s913 + $0x28] sm:$0xf]
  %v925 = vld [vmem:[%s913 + $0x2c] sm:$0xf]
  %v926 = vld [vmem:[%s913 + $0x30] sm:$0xf]
  %v927 = vld [vmem:[%s913 + $0x34] sm:$0xf]
  %v928 = vld [vmem:[%s913 + $0x38] sm:$0xf]
  %v929 = vld [vmem:[%s913 + $0x3c] sm:$0xf]
  %v946 = vunpack.c.l.b16 %v914
  %v947 = vunpack.c.l.b16 %v915
  %v948 = vunpack.c.l.b16 %v916
  %v949 = vunpack.c.l.b16 %v917
  %v950 = vunpack.c.l.b16 %v918
  %v951 = vunpack.c.l.b16 %v919
  %v952 = vunpack.c.l.b16 %v920
  %v953 = vunpack.c.l.b16 %v921
  %v954 = vunpack.c.l.b16 %v922
  %v955 = vunpack.c.l.b16 %v923
  %v956 = vunpack.c.l.b16 %v924
  %v957 = vunpack.c.l.b16 %v925
  %v958 = vunpack.c.l.b16 %v926
  %v959 = vunpack.c.l.b16 %v927
  %v960 = vunpack.c.l.b16 %v928
  %v961 = vunpack.c.l.b16 %v929
  %v962 = vpack.c.b16 %v947, %v946
  %v963 = vpack.c.b16 %v949, %v948
  %v964 = vpack.c.b16 %v951, %v950
  %v965 = vpack.c.b16 %v953, %v952
  %v966 = vpack.c.b16 %v955, %v954
  %v967 = vpack.c.b16 %v957, %v956
  %v968 = vpack.c.b16 %v959, %v958
  %v969 = vpack.c.b16 %v961, %v960
  %978 = vmatprep.subr.bf16.mxu0 0
  %979 = vmatpush1.bf16.msra.mxu0 %v962
  %980 = vmatprep.subr.bf16.mxu0 0
  %981 = vmatpush1.bf16.msra.mxu0 %v963
  %982 = vmatprep.subr.bf16.mxu0 0
  %983 = vmatpush1.bf16.msra.mxu0 %v964
  %984 = vmatprep.subr.bf16.mxu0 0
  %985 = vmatpush1.bf16.msra.mxu0 %v965
  %986 = vmatprep.subr.bf16.mxu0 0
  %987 = vmatpush1.bf16.msra.mxu0 %v966
  %988 = vmatprep.subr.bf16.mxu0 0
  %989 = vmatpush1.bf16.msra.mxu0 %v967
  %990 = vmatprep.subr.bf16.mxu0 0
  %991 = vmatpush1.bf16.msra.mxu0 %v968
  %992 = vmatprep.subr.bf16.mxu0 0
  %993 = vmatpush1.bf16.msra.mxu0 %v969
  %994 = vmatprep.subr.bf16.mxu0 0
  %995 = vmatpush1.bf16.msra.mxu0 0
  %996 = vmatprep.subr.bf16.mxu0 0
  %997 = vmatpush1.bf16.msra.mxu0 0
  %998 = vmatprep.subr.bf16.mxu0 0
  %999 = vmatpush1.bf16.msra.mxu0 0
  %1000 = vmatprep.subr.bf16.mxu0 0
  %1001 = vmatpush1.bf16.msra.mxu0 0
  %1002 = vmatprep.subr.bf16.mxu0 0
  %1003 = vmatpush1.bf16.msra.mxu0 0
  %1004 = vmatprep.subr.bf16.mxu0 0
  %1005 = vmatpush1.bf16.msra.mxu0 0
  %1006 = vmatprep.subr.bf16.mxu0 0
  %1007 = vmatpush1.bf16.msra.mxu0 0
  %1008 = vmatprep.subr.bf16.mxu0 0
  %1009 = vmatpush1.bf16.msra.mxu0 0
  %1010 = vmatprep.mubr.bf16.mxu0 0
  %1011 = vmatmul.mubr.bf16.gmra.mrb[0].mxu0 %v911
  %v1012 = vpop.f32.mrb[0].mxu0
  %v1013 = vadd.f32 0.0, %v1012
  %v1014 = vpop.f32.mrb[0].mxu0
  %v1015 = vpop.f32.mrb[0].mxu0
  %v1016 = vadd.f32 0.0, %v1015
  %v1017 = vpop.f32.mrb[0].mxu0
  %1018 = vmatprep.mubr.bf16.mxu0 0
  %1019 = vmatmul.mubr.bf16.gmra.mrb[0].mxu0 %v912
  %v1020 = vpop.f32.mrb[0].mxu0
  %v1021 = vadd.f32 0.0, %v1020
  %v1022 = vpop.f32.mrb[0].mxu0
  %v1023 = vpop.f32.mrb[0].mxu0
  %v1024 = vadd.f32 0.0, %v1023
  %v1025 = vpop.f32.mrb[0].mxu0
  %1026 = vdwg.mxu0
  %v1027 = vadd.f32 %v897, %v1013
  %v1028 = vadd.f32 %v900, %v1016
  %v1029 = vadd.f32 %v905, %v1021
  %v1030 = vadd.f32 %v908, %v1024
  %v1031 = vmul.f32 %v1027, %v1027
  %v1032 = vmul.f32 %v1028, %v1028
  %v1033 = vmul.f32 %v1029, %v1029
  %v1034 = vmul.f32 %v1030, %v1030
  %1035 = vmatprep.subr.mxu0 0.0
  %1036 = vmatpush1.msra.mxu0 %v394
  %1037 = vmatprep.subr.mxu0 0.0
  %1038 = vmatpush1.msra.mxu0 %v395
  %1039 = vmatprep.subr.mxu0 0.0
  %1040 = vmatpush1.msra.mxu0 %v396
  %1041 = vmatprep.subr.mxu0 0.0
  %1042 = vmatpush1.msra.mxu0 %v397
  %1043 = vmatprep.subr.mxu0 0.0
  %1044 = vmatpush1.msra.mxu0 %v398
  %1045 = vmatprep.subr.mxu0 0.0
  %1046 = vmatpush1.msra.mxu0 %v399
  %1047 = vmatprep.subr.mxu0 0.0
  %1048 = vmatpush1.msra.mxu0 %v400
  %1049 = vmatprep.subr.mxu0 0.0
  %1050 = vmatpush1.msra.mxu0 %v401
  %1051 = vmatprep.subr.mxu0 0.0
  %1052 = vmatpush1.msra.mxu0 %v402
  %1053 = vmatprep.subr.mxu0 0.0
  %1054 = vmatpush1.msra.mxu0 %v403
  %1055 = vmatprep.subr.mxu0 0.0
  %1056 = vmatpush1.msra.mxu0 %v404
  %1057 = vmatprep.subr.mxu0 0.0
  %1058 = vmatpush1.msra.mxu0 %v405
  %1059 = vmatprep.subr.mxu0 0.0
  %1060 = vmatpush1.msra.mxu0 %v406
  %1061 = vmatprep.subr.mxu0 0.0
  %1062 = vmatpush1.msra.mxu0 %v407
  %1063 = vmatprep.subr.mxu0 0.0
  %1064 = vmatpush1.msra.mxu0 %v408
  %1065 = vmatprep.subr.mxu0 0.0
  %1066 = vmatpush1.msra.mxu0 %v409
  %1067 = vmatprep.subr.mxu0 0.0
  %1068 = vmatpush1.msra.mxu0 0.0
  %1069 = vmatprep.subr.mxu0 0.0
  %1070 = vmatpush1.msra.mxu0 0.0
  %1071 = vmatprep.subr.mxu0 0.0
  %1072 = vmatpush1.msra.mxu0 0.0
  %1073 = vmatprep.subr.mxu0 0.0
  %1074 = vmatpush1.msra.mxu0 0.0
  %1075 = vmatprep.subr.mxu0 0.0
  %1076 = vmatpush1.msra.mxu0 0.0
  %1077 = vmatprep.subr.mxu0 0.0
  %1078 = vmatpush1.msra.mxu0 0.0
  %1079 = vmatprep.subr.mxu0 0.0
  %1080 = vmatpush1.msra.mxu0 0.0
  %1081 = vmatprep.subr.mxu0 0.0
  %1082 = vmatpush1.msra.mxu0 0.0
  %1083 = vmatprep.subr.mxu0 0.0
  %1084 = vmatpush1.msra.mxu0 0.0
  %1085 = vmatprep.subr.mxu0 0.0
  %1086 = vmatpush1.msra.mxu0 0.0
  %1087 = vmatprep.subr.mxu0 0.0
  %1088 = vmatpush1.msra.mxu0 0.0
  %1089 = vmatprep.subr.mxu0 0.0
  %1090 = vmatpush1.msra.mxu0 0.0
  %1091 = vmatprep.subr.mxu0 0.0
  %1092 = vmatpush1.msra.mxu0 0.0
  %1093 = vmatprep.subr.mxu0 0.0
  %1094 = vmatpush1.msra.mxu0 0.0
  %1095 = vmatprep.subr.mxu0 0.0
  %1096 = vmatpush1.msra.mxu0 0.0
  %1097 = vmatprep.subr.mxu0 0.0
  %1098 = vmatpush1.msra.mxu0 0.0
  %1099 = vmatprep.mubr.f32.mxu0 0.0
  %1100 = vmatmul.mubr.f32.gmra.mrb[0].mxu0 %v1027
  %v1101 = vpop.f32.mrb[0].mxu0
  %v1102 = vadd.f32 0.0, %v1101
  %v1103 = vpop.f32.mrb[0].mxu0
  %1104 = vmatprep.mubr.f32.mxu0 0.0
  %1105 = vmatmul.mubr.f32.gmra.mrb[0].mxu0 %v1028
  %v1106 = vpop.f32.mrb[0].mxu0
  %v1107 = vadd.f32 0.0, %v1106
  %v1108 = vpop.f32.mrb[0].mxu0
  %1109 = vmatprep.mubr.f32.mxu0 0.0
  %1110 = vmatmul.mubr.f32.gmra.mrb[0].mxu0 %v1029
  %v1111 = vpop.f32.mrb[0].mxu0
  %v1112 = vadd.f32 0.0, %v1111
  %v1113 = vpop.f32.mrb[0].mxu0
  %1114 = vmatprep.mubr.f32.mxu0 0.0
  %1115 = vmatmul.mubr.f32.gmra.mrb[0].mxu0 %v1030
  %v1116 = vpop.f32.mrb[0].mxu0
  %v1117 = vadd.f32 0.0, %v1116
  %v1118 = vpop.f32.mrb[0].mxu0
  %1119 = vmatprep.mubr.f32.mxu0 0.0
  %1120 = vmatmul.mubr.f32.gmra.mrb[0].mxu0 %v1031
  %v1121 = vpop.f32.mrb[0].mxu0
  %v1122 = vadd.f32 0.0, %v1121
  %v1123 = vpop.f32.mrb[0].mxu0
  %1124 = vmatprep.mubr.f32.mxu0 0.0
  %1125 = vmatmul.mubr.f32.gmra.mrb[0].mxu0 %v1032
  %v1126 = vpop.f32.mrb[0].mxu0
  %v1127 = vadd.f32 0.0, %v1126
  %v1128 = vpop.f32.mrb[0].mxu0
  %1129 = vmatprep.mubr.f32.mxu0 0.0
  %1130 = vmatmul.mubr.f32.gmra.mrb[0].mxu0 %v1033
  %v1131 = vpop.f32.mrb[0].mxu0
  %v1132 = vadd.f32 0.0, %v1131
  %v1133 = vpop.f32.mrb[0].mxu0
  %1134 = vmatprep.mubr.f32.mxu0 0.0
  %1135 = vmatmul.mubr.f32.gmra.mrb[0].mxu0 %v1034
  %v1136 = vpop.f32.mrb[0].mxu0
  %v1137 = vadd.f32 0.0, %v1136
  %v1138 = vpop.f32.mrb[0].mxu0
  %1139 = vdwg.mxu0
  %v1140 = vsel %vm515, %v1102, 0.0
  %v1141 = vsel %vm515, %v1107, 0.0
  %v1142 = vadd.f32 %v1140, %v1141
  %v1143 = vsel %vm515, %v1112, 0.0
  %v1144 = vadd.f32 %v1142, %v1143
  %v1145 = vsel %vm515, %v1117, 0.0
  %v1146 = vadd.f32 %v1144, %v1145
  %v1147 = vrot.slane %v1146, 4
  %v1148 = vadd.f32 %v1146, %v1147
  %v1149 = vrot.slane %v1148, 2
  %v1150 = vadd.f32 %v1148, %v1149
  %v1151 = vrot.slane %v1150, 1
  %v1152 = vadd.f32 %v1150, %v1151
  %v1153 = vmul.f32 %v1152, 0.001953125
  %v1154 = vsel %vm515, %v1122, 0.0
  %v1155 = vsel %vm515, %v1127, 0.0
  %v1156 = vadd.f32 %v1154, %v1155
  %v1157 = vsel %vm515, %v1132, 0.0
  %v1158 = vadd.f32 %v1156, %v1157
  %v1159 = vsel %vm515, %v1137, 0.0
  %v1160 = vadd.f32 %v1158, %v1159
  %v1161 = vrot.slane %v1160, 4
  %v1162 = vadd.f32 %v1160, %v1161
  %v1163 = vrot.slane %v1162, 2
  %v1164 = vadd.f32 %v1162, %v1163
  %v1165 = vrot.slane %v1164, 1
  %v1166 = vadd.f32 %v1164, %v1165
  %v1167 = vmul.f32 %v1166, 0.001953125
  %v1168 = vsel %vm544, %v1153, %v1167
  %v1170 = vsel %vm515, %v1168, 0
  %1172 = vmatprep.subr.mxu0 0.0
  %1173 = vmatpush1.msra.mxu0 %v546
  %1174 = vmatprep.subr.mxu0 0.0
  %1175 = vmatpush1.msra.mxu0 0.0
  %1176 = vmatprep.subr.mxu0 0.0
  %1177 = vmatpush1.msra.mxu0 0.0
  %1178 = vmatprep.subr.mxu0 0.0
  %1179 = vmatpush1.msra.mxu0 0.0
  %1180 = vmatprep.subr.mxu0 0.0
  %1181 = vmatpush1.msra.mxu0 0.0
  %1182 = vmatprep.subr.mxu0 0.0
  %1183 = vmatpush1.msra.mxu0 0.0
  %1184 = vmatprep.subr.mxu0 0.0
  %1185 = vmatpush1.msra.mxu0 0.0
  %1186 = vmatprep.subr.mxu0 0.0
  %1187 = vmatpush1.msra.mxu0 0.0
  %1188 = vmatprep.subr.mxu0 0.0
  %1189 = vmatpush1.msra.mxu0 0.0
  %1190 = vmatprep.subr.mxu0 0.0
  %1191 = vmatpush1.msra.mxu0 0.0
  %1192 = vmatprep.subr.mxu0 0.0
  %1193 = vmatpush1.msra.mxu0 0.0
  %1194 = vmatprep.subr.mxu0 0.0
  %1195 = vmatpush1.msra.mxu0 0.0
  %1196 = vmatprep.subr.mxu0 0.0
  %1197 = vmatpush1.msra.mxu0 0.0
  %1198 = vmatprep.subr.mxu0 0.0
  %1199 = vmatpush1.msra.mxu0 0.0
  %1200 = vmatprep.subr.mxu0 0.0
  %1201 = vmatpush1.msra.mxu0 0.0
  %1202 = vmatprep.subr.mxu0 0.0
  %1203 = vmatpush1.msra.mxu0 0.0
  %1204 = vmatprep.subr.mxu0 0.0
  %1205 = vmatpush1.msra.mxu0 0.0
  %1206 = vmatprep.subr.mxu0 0.0
  %1207 = vmatpush1.msra.mxu0 0.0
  %1208 = vmatprep.subr.mxu0 0.0
  %1209 = vmatpush1.msra.mxu0 0.0
  %1210 = vmatprep.subr.mxu0 0.0
  %1211 = vmatpush1.msra.mxu0 0.0
  %1212 = vmatprep.subr.mxu0 0.0
  %1213 = vmatpush1.msra.mxu0 0.0
  %1214 = vmatprep.subr.mxu0 0.0
  %1215 = vmatpush1.msra.mxu0 0.0
  %1216 = vmatprep.subr.mxu0 0.0
  %1217 = vmatpush1.msra.mxu0 0.0
  %1218 = vmatprep.subr.mxu0 0.0
  %1219 = vmatpush1.msra.mxu0 0.0
  %1220 = vmatprep.subr.mxu0 0.0
  %1221 = vmatpush1.msra.mxu0 0.0
  %1222 = vmatprep.subr.mxu0 0.0
  %1223 = vmatpush1.msra.mxu0 0.0
  %1224 = vmatprep.subr.mxu0 0.0
  %1225 = vmatpush1.msra.mxu0 0.0
  %1226 = vmatprep.subr.mxu0 0.0
  %1227 = vmatpush1.msra.mxu0 0.0
  %1228 = vmatprep.subr.mxu0 0.0
  %1229 = vmatpush1.msra.mxu0 0.0
  %1230 = vmatprep.subr.mxu0 0.0
  %1231 = vmatpush1.msra.mxu0 0.0
  %1232 = vmatprep.subr.mxu0 0.0
  %1233 = vmatpush1.msra.mxu0 0.0
  %1234 = vmatprep.subr.mxu0 0.0
  %1235 = vmatpush1.msra.mxu0 0.0
  %1236 = vmatprep.mubr.f32.mxu0 0.0
  %1237 = vmatmul.mubr.f32.gmra.mrb[0].mxu0 %v1170
  %v1238 = vpop.f32.mrb[0].mxu0
  %v1239 = vadd.f32 0.0, %v1238
  %v1240 = vpop.f32.mrb[0].mxu0
  %1241 = vdwg.mxu0
  %v1242 = vmul.f32 %v1239, %v1239
  %v1244 = vrot.slane %v1242, 7
  %v1246 = vsub.f32 %v1239, %v1244
  %v1247 = vadd.f32 %v1246, 1e-05
  %v1248 = vrsqrt.pop %v1247
  %v1250 = vrot.slane %v1248, 7
  %v1252 = vmul.f32 %v24, %v1250
  %v1254 = vrot.slane %v1252, 2
  %v1256 = vmul.f32 %v1239, %v1254
  %v1258 = vrot.slane %v1256, 5
  %v1260 = vsub.f32 %v24, %v1258
  %v1261 = vlaneseq
  %v1262 = vshrl.u32 %v1261, 7
  %v1263 = vsub.s32 2, %v1262
  %v1264 = vrot.slane %v1252, %v1263
  %v1265 = vmul.f32 %v1027, %v1264
  %v1266 = vmul.f32 %v1028, %v1264
  %v1267 = vmul.f32 %v1029, %v1264
  %v1268 = vmul.f32 %v1030, %v1264
  %v1269 = vlaneseq
  %v1270 = vshrl.u32 %v1269, 7
  %v1271 = vsub.s32 3, %v1270
  %v1272 = vrot.slane %v1260, %v1271
  %v1273 = vadd.f32 %v1265, %v1272
  %v1274 = vadd.f32 %v1266, %v1272
  %v1275 = vadd.f32 %v1267, %v1272
  %v1276 = vadd.f32 %v1268, %v1272
  %v1277 = vmax.f32 %v1273, 0.0
  %v1278 = vmax.f32 %v1274, 0.0
  %v1279 = vmax.f32 %v1275, 0.0
  %v1280 = vmax.f32 %v1276, 0.0
  %1281 = vst [vmem:[%s6] sm:$0xff] %v1277
  %1282 = vst [vmem:[%s6 + $0x8] sm:$0xff] %v1278
  %1283 = vst [vmem:[%s6 + $0x10] sm:$0xff] %v1279
  %1284 = vst [vmem:[%s6 + $0x18] sm:$0xff] %v1280
  // Predicated region
  $region26: #{double_conv.1} parent=0 // pred_check
    _
  $region27: #{double_conv.1} parent=0 // pred_check_branch
    %1286 = sbr.rel (0) target = $region29
  $region28: #{double_conv.1} parent=0 // pred_region
    _
  $region29: #{double_conv.1} parent=0 // pred_fallthru
    _
  // Predicated region
  $region30: #{double_conv.1} parent=0 // pred_check
    _
  $region31: #{double_conv.1} parent=0 // pred_check_branch
    %1288 = sbr.rel (0) target = $region33
  $region32: #{double_conv.1} parent=0 // pred_region
    _
  $region33: #{double_conv.1} parent=0 // pred_fallthru
    _

</llo_original>
